<compile_context>
chip_gen: v6e
topology: v6e:2x2x1
jax: 0.10.0
libtpu: 0.0.40
codegen_flags: <defaults>
</compile_context>

<pallas_src>
import math

import jax
import jax.numpy as jnp
from jax import lax
from jax.experimental import pallas as pl
from jax.experimental.pallas import tpu as pltpu

# small test config (config.n_embd=32, n_head=4, block_size=T=8)
B, T, C, NH = 2, 8, 32, 4
HD = C // NH
BT = B * T
EPS = 1e-5


def _layernorm(v, w, b):
    mu = jnp.mean(v, axis=-1, keepdims=True)
    var = jnp.mean((v - mu) ** 2, axis=-1, keepdims=True)
    return (v - mu) * lax.rsqrt(var + EPS) * w + b


def block_kernel(
    xall_ref, p_ref,
    ln1w_ref, ln1b_ref, ln2w_ref, ln2b_ref,
    wqkv_ref, bqkv_ref,
    wp_ref, bp_ref, w1_ref, b1_ref, w2_ref, b2_ref,
    out_ref,
):
    bf16 = jnp.bfloat16
    xall = xall_ref[...]          # (2*BT, C): rows [0:BT]=x, [BT:2BT]=x_kv
    x = xall[0:BT, :]             # residual-stream input

    # --- single layernorm over both streams (ln1 params shared) ------------
    ln_all = _layernorm(xall, ln1w_ref[...], ln1b_ref[...])   # (2BT, C)

    # --- single fused QKV projection (bf16 operands, f32 accumulation) -----
    # Wqkv = [Wq*scale | Wk | Wv], bqkv = [bq*scale, bk, bv]; scale folded in.
    qkv = jnp.dot(ln_all.astype(bf16), wqkv_ref[...],
                  preferred_element_type=jnp.float32) + bqkv_ref[...]  # (2BT, 3C)

    # --- stack (batch, head) into one leading axis: (B*NH, T, HD) ----------
    q3 = jnp.stack([qkv[b * T:(b + 1) * T, h * HD:(h + 1) * HD]
                    for b in range(B) for h in range(NH)], axis=0)
    k3 = jnp.stack([qkv[BT + b * T:BT + (b + 1) * T, C + h * HD:C + (h + 1) * HD]
                    for b in range(B) for h in range(NH)], axis=0)
    v3 = jnp.stack([qkv[BT + b * T:BT + (b + 1) * T, 2 * C + h * HD:2 * C + (h + 1) * HD]
                    for b in range(B) for h in range(NH)], axis=0)

    # --- batched attention over all (batch, head) pairs at once ------------
    att = lax.dot_general(
        q3.astype(bf16), k3.astype(bf16),
        dimension_numbers=(((2,), (2,)), ((0,), (0,))),
        preferred_element_type=jnp.float32)                  # (B*NH, T, T)
    att = p_ref[...] + att                                    # adaptive bias

    row = lax.broadcasted_iota(jnp.int32, (T, T), 0)
    col = lax.broadcasted_iota(jnp.int32, (T, T), 1)
    causal = (col <= row)[None]                               # tril mask
    att = jnp.where(causal, att, -jnp.inf)                    # causal masked_fill

    m = jnp.max(att, axis=-1, keepdims=True)
    e = jnp.exp(att - m)
    pr = e * pl.reciprocal(jnp.sum(e, axis=-1, keepdims=True), approx=True)

    y3 = lax.dot_general(
        pr.astype(bf16), v3.astype(bf16),
        dimension_numbers=(((2,), (1,)), ((0,), (0,))),
        preferred_element_type=jnp.float32)                   # (B*NH, T, HD)

    # --- merge heads back to (B*T, C) and single output projection ---------
    y = jnp.concatenate(
        [jnp.concatenate([y3[b * NH + h] for h in range(NH)], axis=-1)
         for b in range(B)], axis=0)                          # (BT, C)

    out_attn = jnp.dot(y.astype(bf16), wp_ref[...],
                       preferred_element_type=jnp.float32) + bp_ref[...]
    x1 = x + out_attn                                         # first residual

    # --- MLP ----------------------------------------------------------------
    lx2 = _layernorm(x1, ln2w_ref[...], ln2b_ref[...])
    hmlp = jnp.dot(lx2.astype(bf16), w1_ref[...],
                   preferred_element_type=jnp.float32) + b1_ref[...]
    # exact GELU (PyTorch nn.GELU default)
    hmlp = 0.5 * hmlp * (1.0 + lax.erf(hmlp * (1.0 / math.sqrt(2.0))))
    mlp = jnp.dot(hmlp.astype(bf16), w2_ref[...],
                  preferred_element_type=jnp.float32) + b2_ref[...]

    out_ref[...] = x1 + mlp                                   # second residual


def block_forward(x, x_kv, p, prm):
    """Pallas wrapper. Returns the updated sequence [B, T, C]."""
    bf16 = jnp.bfloat16
    scale = 1.0 / math.sqrt(HD)

    # rows [0:BT] = x (query stream), rows [BT:2BT] = x_kv (key/value stream)
    xall = jnp.concatenate([x.reshape(BT, C), x_kv.reshape(BT, C)], axis=0)
    pf = p.reshape(B * NH, T, T)

    # natural-layout weights; attention scale folded into Wq/bq (exact);
    # cast once to bf16 (halves weight DMA bytes).
    wqkv = jnp.concatenate(
        [prm["Wq"] * scale, prm["Wk"], prm["Wv"]], axis=1).astype(bf16)   # (C, 3C)
    bqkv = jnp.concatenate(
        [prm["bq"] * scale, prm["bk"], prm["bv"]]).reshape(1, 3 * C)
    wp = prm["Wp"].astype(bf16)
    w1 = prm["W1"].astype(bf16)
    w2 = prm["W2"].astype(bf16)

    args = (
        xall, pf,
        prm["ln1w"].reshape(1, C), prm["ln1b"].reshape(1, C),
        prm["ln2w"].reshape(1, C), prm["ln2b"].reshape(1, C),
        wqkv, bqkv,
        wp, prm["bp"].reshape(1, C),
        w1, prm["b1"].reshape(1, 4 * C),
        w2, prm["b2"].reshape(1, C),
    )

    full = lambda a: pl.BlockSpec(a.shape, lambda i: (0,) * a.ndim)

    # Single grid step: batch is folded into rows, so the whole block runs in
    # one kernel invocation (no per-step pipeline overhead on 1-TC chips).
    # TODO(synk): at the real T~827 config, tile the key dimension flash-style
    # (online softmax) and set vmem_limit_bytes explicitly for v7x's smaller
    # VMEM instead of holding the full (NH,T,T) bias block resident.
    out = pl.pallas_call(
        block_kernel,
        out_shape=jax.ShapeDtypeStruct((BT, C), jnp.float32),
        grid=(1,),
        in_specs=[full(a) for a in args],
        out_specs=pl.BlockSpec((BT, C), lambda i: (0, 0)),
        compiler_params=pltpu.CompilerParams(dimension_semantics=("arbitrary",)),
    )(*args)
    return out.reshape(B, T, C)


# ---------------- pure-JAX reference (mirrors the PyTorch forward) ----------
def _reference(x, x_kv, p, prm):
    def ln(v, w, b):
        mu = v.mean(-1, keepdims=True)
        var = ((v - mu) ** 2).mean(-1, keepdims=True)
        return (v - mu) / jnp.sqrt(var + EPS) * w + b

    lx = ln(x, prm["ln1w"], prm["ln1b"])
    lkv = ln(x_kv, prm["ln1w"], prm["ln1b"])
    q = lx @ prm["Wq"] + prm["bq"]
    k = lkv @ prm["Wk"] + prm["bk"]
    v = lkv @ prm["Wv"] + prm["bv"]
    split = lambda t: t.reshape(B, T, NH, HD).transpose(0, 2, 1, 3)
    q, k, v = split(q), split(k), split(v)
    att = jnp.einsum("bhtd,bhsd->bhts", q, k) / math.sqrt(HD)
    att = p + att
    causal = jnp.tril(jnp.ones((T, T), bool))
    att = jnp.where(causal[None, None], att, -jnp.inf)
    att = jax.nn.softmax(att, axis=-1)
    y = jnp.einsum("bhts,bhsd->bhtd", att, v)
    y = y.transpose(0, 2, 1, 3).reshape(B, T, C)
    y = y @ prm["Wp"] + prm["bp"]
    x1 = x + y
    lx2 = ln(x1, prm["ln2w"], prm["ln2b"])
    h = lx2 @ prm["W1"] + prm["b1"]
    h = 0.5 * h * (1.0 + jax.scipy.special.erf(h / math.sqrt(2.0)))
    return x1 + h @ prm["W2"] + prm["b2"]


if __name__ == "__main__":
    key = jax.random.PRNGKey(0)
    ks = jax.random.split(key, 24)
    f32 = jnp.float32

    x = jax.random.normal(ks[0], (B, T, C), f32)
    x_kv = jax.random.normal(ks[1], (B, T, C), f32)
    p = 0.1 * jax.random.normal(ks[2], (B, NH, T, T), f32)   # adaptive bias `p`

    s = 0.05
    prm = dict(
        ln1w=1.0 + 0.1 * jax.random.normal(ks[3], (C,), f32),
        ln1b=0.1 * jax.random.normal(ks[4], (C,), f32),
        ln2w=1.0 + 0.1 * jax.random.normal(ks[5], (C,), f32),
        ln2b=0.1 * jax.random.normal(ks[6], (C,), f32),
        Wq=s * jax.random.normal(ks[7], (C, C), f32),
        bq=s * jax.random.normal(ks[8], (C,), f32),
        Wk=s * jax.random.normal(ks[9], (C, C), f32),
        bk=s * jax.random.normal(ks[10], (C,), f32),
        Wv=s * jax.random.normal(ks[11], (C, C), f32),
        bv=s * jax.random.normal(ks[12], (C,), f32),
        Wp=s * jax.random.normal(ks[13], (C, C), f32),
        bp=s * jax.random.normal(ks[14], (C,), f32),
        W1=s * jax.random.normal(ks[15], (C, 4 * C), f32),
        b1=s * jax.random.normal(ks[16], (4 * C,), f32),
        W2=s * jax.random.normal(ks[17], (4 * C, C), f32),
        b2=s * jax.random.normal(ks[18], (C,), f32),
    )

    out = block_forward(x, x_kv, p, prm)
    out = jax.block_until_ready(out)

    ref = _reference(x, x_kv, p, prm)
    assert out.shape == (B, T, C)
    assert bool(jnp.allclose(out, ref, atol=2e-2, rtol=2e-2)), "mismatch vs reference"

    # TODO(synk): epipolar ('forward'/'backward'/'bidirectional') branches and
    # mask_cam hard-coded slice indices (285/541/571/827) require T>=827 and
    # are not exercised here; dropout is identity (eval mode); attention-map
    # returns (return_attn=True) are not produced.
    print("KERNEL_OK")
</pallas_src>

<mosaic_0001>
module attributes {stable_mosaic.version = 11 : i64} {
  func.func @block_kernel(%arg0: i32, %arg1: memref<32x32xf32, #tpu.memory_space<vmem>>, %arg2: memref<8x8x8xf32, #tpu.memory_space<vmem>>, %arg3: memref<1x32xf32, #tpu.memory_space<vmem>>, %arg4: memref<1x32xf32, #tpu.memory_space<vmem>>, %arg5: memref<1x32xf32, #tpu.memory_space<vmem>>, %arg6: memref<1x32xf32, #tpu.memory_space<vmem>>, %arg7: memref<32x96xbf16, #tpu.memory_space<vmem>>, %arg8: memref<1x96xf32, #tpu.memory_space<vmem>>, %arg9: memref<32x32xbf16, #tpu.memory_space<vmem>>, %arg10: memref<1x32xf32, #tpu.memory_space<vmem>>, %arg11: memref<32x128xbf16, #tpu.memory_space<vmem>>, %arg12: memref<1x128xf32, #tpu.memory_space<vmem>>, %arg13: memref<128x32xbf16, #tpu.memory_space<vmem>>, %arg14: memref<1x32xf32, #tpu.memory_space<vmem>>, %arg15: memref<16x32xf32, #tpu.memory_space<vmem>>) attributes {dimension_semantics = [#tpu.dimension_semantics<arbitrary>], iteration_bounds = array<i64: 1>, scalar_prefetch = 0 : i64, scratch_operands = 0 : i64, tpu.core_type = #tpu.core_type<tc>, window_params = [{pipeline_mode = #tpu.pipeline_mode<synchronous>, transform_indices = @transform_0, window_bounds = array<i64: 32, 32>}, {pipeline_mode = #tpu.pipeline_mode<synchronous>, transform_indices = @transform_1, window_bounds = array<i64: 8, 8, 8>}, {pipeline_mode = #tpu.pipeline_mode<synchronous>, transform_indices = @transform_2, window_bounds = array<i64: 1, 32>}, {pipeline_mode = #tpu.pipeline_mode<synchronous>, transform_indices = @transform_3, window_bounds = array<i64: 1, 32>}, {pipeline_mode = #tpu.pipeline_mode<synchronous>, transform_indices = @transform_4, window_bounds = array<i64: 1, 32>}, {pipeline_mode = #tpu.pipeline_mode<synchronous>, transform_indices = @transform_5, window_bounds = array<i64: 1, 32>}, {pipeline_mode = #tpu.pipeline_mode<synchronous>, transform_indices = @transform_6, window_bounds = array<i64: 32, 96>}, {pipeline_mode = #tpu.pipeline_mode<synchronous>, transform_indices = @transform_7, window_bounds = array<i64: 1, 96>}, {pipeline_mode = #tpu.pipeline_mode<synchronous>, transform_indices = @transform_8, window_bounds = array<i64: 32, 32>}, {pipeline_mode = #tpu.pipeline_mode<synchronous>, transform_indices = @transform_9, window_bounds = array<i64: 1, 32>}, {pipeline_mode = #tpu.pipeline_mode<synchronous>, transform_indices = @transform_10, window_bounds = array<i64: 32, 128>}, {pipeline_mode = #tpu.pipeline_mode<synchronous>, transform_indices = @transform_11, window_bounds = array<i64: 1, 128>}, {pipeline_mode = #tpu.pipeline_mode<synchronous>, transform_indices = @transform_12, window_bounds = array<i64: 128, 32>}, {pipeline_mode = #tpu.pipeline_mode<synchronous>, transform_indices = @transform_13, window_bounds = array<i64: 1, 32>}, {pipeline_mode = #tpu.pipeline_mode<synchronous>, transform_indices = @transform_14, window_bounds = array<i64: 16, 32>}]} {
    %c0 = arith.constant 0 : index
    %c0_0 = arith.constant 0 : index
    %0 = vector.load %arg1[%c0, %c0_0] : memref<32x32xf32, #tpu.memory_space<vmem>>, vector<32x32xf32>
    %1 = vector.extract_strided_slice %0 {offsets = [0, 0], sizes = [16, 32], strides = [1, 1]} : vector<32x32xf32> to vector<16x32xf32>
    %c0_1 = arith.constant 0 : index
    %c0_2 = arith.constant 0 : index
    %2 = vector.load %arg3[%c0_1, %c0_2] : memref<1x32xf32, #tpu.memory_space<vmem>>, vector<1x32xf32>
    %c0_3 = arith.constant 0 : index
    %c0_4 = arith.constant 0 : index
    %3 = vector.load %arg4[%c0_3, %c0_4] : memref<1x32xf32, #tpu.memory_space<vmem>>, vector<1x32xf32>
    %cst = arith.constant dense<0.000000e+00> : vector<32xf32>
    %4 = vector.multi_reduction <add>, %0, %cst [1] : vector<32x32xf32> to vector<32xf32>
    %5 = vector.shape_cast %4 : vector<32xf32> to vector<32x1xf32>
    %cst_5 = arith.constant 3.200000e+01 : f32
    %6 = vector.broadcast %cst_5 : f32 to vector<32x1xf32>
    %7 = arith.divf %5, %6 : vector<32x1xf32>
    %8 = vector.broadcast %7 : vector<32x1xf32> to vector<32x32xf32>
    %9 = arith.subf %0, %8 : vector<32x32xf32>
    %10 = arith.mulf %9, %9 : vector<32x32xf32>
    %cst_6 = arith.constant dense<0.000000e+00> : vector<32xf32>
    %11 = vector.multi_reduction <add>, %10, %cst_6 [1] : vector<32x32xf32> to vector<32xf32>
    %12 = vector.shape_cast %11 : vector<32xf32> to vector<32x1xf32>
    %cst_7 = arith.constant 3.200000e+01 : f32
    %13 = vector.broadcast %cst_7 : f32 to vector<32x1xf32>
    %14 = arith.divf %12, %13 : vector<32x1xf32>
    %15 = vector.broadcast %7 : vector<32x1xf32> to vector<32x32xf32>
    %16 = arith.subf %0, %15 : vector<32x32xf32>
    %cst_8 = arith.constant 9.99999974E-6 : f32
    %17 = vector.broadcast %cst_8 : f32 to vector<32x1xf32>
    %18 = arith.addf %14, %17 : vector<32x1xf32>
    %19 = math.rsqrt %18 : vector<32x1xf32>
    %20 = vector.broadcast %19 : vector<32x1xf32> to vector<32x32xf32>
    %21 = arith.mulf %16, %20 : vector<32x32xf32>
    %22 = vector.broadcast %2 : vector<1x32xf32> to vector<32x32xf32>
    %23 = arith.mulf %21, %22 : vector<32x32xf32>
    %24 = vector.broadcast %3 : vector<1x32xf32> to vector<32x32xf32>
    %25 = arith.addf %23, %24 : vector<32x32xf32>
    %26 = arith.truncf %25 : vector<32x32xf32> to vector<32x32xbf16>
    %c0_9 = arith.constant 0 : index
    %c0_10 = arith.constant 0 : index
    %27 = vector.load %arg7[%c0_9, %c0_10] : memref<32x96xbf16, #tpu.memory_space<vmem>>, vector<32x96xbf16>
    %cst_11 = arith.constant dense<0.000000e+00> : vector<32x96xf32>
    %28 = tpu.matmul %26, %27, %cst_11 {dimension_numbers = #tpu.dot_dimension_numbers<[1], [0], [0], [1], [0, 0, 1, 1], [], []>} : vector<32x32xbf16>, vector<32x96xbf16>, vector<32x96xf32> -> vector<32x96xf32>
    %c0_12 = arith.constant 0 : index
    %c0_13 = arith.constant 0 : index
    %29 = vector.load %arg8[%c0_12, %c0_13] : memref<1x96xf32, #tpu.memory_space<vmem>>, vector<1x96xf32>
    %30 = vector.broadcast %29 : vector<1x96xf32> to vector<32x96xf32>
    %31 = arith.addf %28, %30 : vector<32x96xf32>
    %32 = vector.extract_strided_slice %31 {offsets = [0, 0], sizes = [8, 8], strides = [1, 1]} : vector<32x96xf32> to vector<8x8xf32>
    %33 = vector.extract_strided_slice %31 {offsets = [0, 8], sizes = [8, 8], strides = [1, 1]} : vector<32x96xf32> to vector<8x8xf32>
    %34 = vector.extract_strided_slice %31 {offsets = [0, 16], sizes = [8, 8], strides = [1, 1]} : vector<32x96xf32> to vector<8x8xf32>
    %35 = vector.extract_strided_slice %31 {offsets = [0, 24], sizes = [8, 8], strides = [1, 1]} : vector<32x96xf32> to vector<8x8xf32>
    %36 = vector.extract_strided_slice %31 {offsets = [8, 0], sizes = [8, 8], strides = [1, 1]} : vector<32x96xf32> to vector<8x8xf32>
    %37 = vector.extract_strided_slice %31 {offsets = [8, 8], sizes = [8, 8], strides = [1, 1]} : vector<32x96xf32> to vector<8x8xf32>
    %38 = vector.extract_strided_slice %31 {offsets = [8, 16], sizes = [8, 8], strides = [1, 1]} : vector<32x96xf32> to vector<8x8xf32>
    %39 = vector.extract_strided_slice %31 {offsets = [8, 24], sizes = [8, 8], strides = [1, 1]} : vector<32x96xf32> to vector<8x8xf32>
    %40 = vector.shape_cast %32 : vector<8x8xf32> to vector<1x8x8xf32>
    %41 = vector.shape_cast %33 : vector<8x8xf32> to vector<1x8x8xf32>
    %42 = vector.shape_cast %34 : vector<8x8xf32> to vector<1x8x8xf32>
    %43 = vector.shape_cast %35 : vector<8x8xf32> to vector<1x8x8xf32>
    %44 = vector.shape_cast %36 : vector<8x8xf32> to vector<1x8x8xf32>
    %45 = vector.shape_cast %37 : vector<8x8xf32> to vector<1x8x8xf32>
    %46 = vector.shape_cast %38 : vector<8x8xf32> to vector<1x8x8xf32>
    %47 = vector.shape_cast %39 : vector<8x8xf32> to vector<1x8x8xf32>
    %48 = tpu.concatenate %40, %41, %42, %43, %44, %45, %46, %47 in 0 : vector<1x8x8xf32>, vector<1x8x8xf32>, vector<1x8x8xf32>, vector<1x8x8xf32>, vector<1x8x8xf32>, vector<1x8x8xf32>, vector<1x8x8xf32>, vector<1x8x8xf32> -> vector<8x8x8xf32>
    %49 = vector.extract_strided_slice %31 {offsets = [16, 32], sizes = [8, 8], strides = [1, 1]} : vector<32x96xf32> to vector<8x8xf32>
    %50 = vector.extract_strided_slice %31 {offsets = [16, 40], sizes = [8, 8], strides = [1, 1]} : vector<32x96xf32> to vector<8x8xf32>
    %51 = vector.extract_strided_slice %31 {offsets = [16, 48], sizes = [8, 8], strides = [1, 1]} : vector<32x96xf32> to vector<8x8xf32>
    %52 = vector.extract_strided_slice %31 {offsets = [16, 56], sizes = [8, 8], strides = [1, 1]} : vector<32x96xf32> to vector<8x8xf32>
    %53 = vector.extract_strided_slice %31 {offsets = [24, 32], sizes = [8, 8], strides = [1, 1]} : vector<32x96xf32> to vector<8x8xf32>
    %54 = vector.extract_strided_slice %31 {offsets = [24, 40], sizes = [8, 8], strides = [1, 1]} : vector<32x96xf32> to vector<8x8xf32>
    %55 = vector.extract_strided_slice %31 {offsets = [24, 48], sizes = [8, 8], strides = [1, 1]} : vector<32x96xf32> to vector<8x8xf32>
    %56 = vector.extract_strided_slice %31 {offsets = [24, 56], sizes = [8, 8], strides = [1, 1]} : vector<32x96xf32> to vector<8x8xf32>
    %57 = vector.shape_cast %49 : vector<8x8xf32> to vector<1x8x8xf32>
    %58 = vector.shape_cast %50 : vector<8x8xf32> to vector<1x8x8xf32>
    %59 = vector.shape_cast %51 : vector<8x8xf32> to vector<1x8x8xf32>
    %60 = vector.shape_cast %52 : vector<8x8xf32> to vector<1x8x8xf32>
    %61 = vector.shape_cast %53 : vector<8x8xf32> to vector<1x8x8xf32>
    %62 = vector.shape_cast %54 : vector<8x8xf32> to vector<1x8x8xf32>
    %63 = vector.shape_cast %55 : vector<8x8xf32> to vector<1x8x8xf32>
    %64 = vector.shape_cast %56 : vector<8x8xf32> to vector<1x8x8xf32>
    %65 = tpu.concatenate %57, %58, %59, %60, %61, %62, %63, %64 in 0 : vector<1x8x8xf32>, vector<1x8x8xf32>, vector<1x8x8xf32>, vector<1x8x8xf32>, vector<1x8x8xf32>, vector<1x8x8xf32>, vector<1x8x8xf32>, vector<1x8x8xf32> -> vector<8x8x8xf32>
    %66 = vector.extract_strided_slice %31 {offsets = [16, 64], sizes = [8, 8], strides = [1, 1]} : vector<32x96xf32> to vector<8x8xf32>
    %67 = vector.extract_strided_slice %31 {offsets = [16, 72], sizes = [8, 8], strides = [1, 1]} : vector<32x96xf32> to vector<8x8xf32>
    %68 = vector.extract_strided_slice %31 {offsets = [16, 80], sizes = [8, 8], strides = [1, 1]} : vector<32x96xf32> to vector<8x8xf32>
    %69 = vector.extract_strided_slice %31 {offsets = [16, 88], sizes = [8, 8], strides = [1, 1]} : vector<32x96xf32> to vector<8x8xf32>
    %70 = vector.extract_strided_slice %31 {offsets = [24, 64], sizes = [8, 8], strides = [1, 1]} : vector<32x96xf32> to vector<8x8xf32>
    %71 = vector.extract_strided_slice %31 {offsets = [24, 72], sizes = [8, 8], strides = [1, 1]} : vector<32x96xf32> to vector<8x8xf32>
    %72 = vector.extract_strided_slice %31 {offsets = [24, 80], sizes = [8, 8], strides = [1, 1]} : vector<32x96xf32> to vector<8x8xf32>
    %73 = vector.extract_strided_slice %31 {offsets = [24, 88], sizes = [8, 8], strides = [1, 1]} : vector<32x96xf32> to vector<8x8xf32>
    %74 = vector.shape_cast %66 : vector<8x8xf32> to vector<1x8x8xf32>
    %75 = vector.shape_cast %67 : vector<8x8xf32> to vector<1x8x8xf32>
    %76 = vector.shape_cast %68 : vector<8x8xf32> to vector<1x8x8xf32>
    %77 = vector.shape_cast %69 : vector<8x8xf32> to vector<1x8x8xf32>
    %78 = vector.shape_cast %70 : vector<8x8xf32> to vector<1x8x8xf32>
    %79 = vector.shape_cast %71 : vector<8x8xf32> to vector<1x8x8xf32>
    %80 = vector.shape_cast %72 : vector<8x8xf32> to vector<1x8x8xf32>
    %81 = vector.shape_cast %73 : vector<8x8xf32> to vector<1x8x8xf32>
    %82 = tpu.concatenate %74, %75, %76, %77, %78, %79, %80, %81 in 0 : vector<1x8x8xf32>, vector<1x8x8xf32>, vector<1x8x8xf32>, vector<1x8x8xf32>, vector<1x8x8xf32>, vector<1x8x8xf32>, vector<1x8x8xf32>, vector<1x8x8xf32> -> vector<8x8x8xf32>
    %83 = arith.truncf %48 : vector<8x8x8xf32> to vector<8x8x8xbf16>
    %84 = arith.truncf %65 : vector<8x8x8xf32> to vector<8x8x8xbf16>
    %cst_14 = arith.constant dense<0.000000e+00> : vector<8x8x8xf32>
    %85 = tpu.matmul %83, %84, %cst_14 {dimension_numbers = #tpu.dot_dimension_numbers<[2], [2], [1], [1], [0, 0, 0, 1, 1, 1], [0], [0]>} : vector<8x8x8xbf16>, vector<8x8x8xbf16>, vector<8x8x8xf32> -> vector<8x8x8xf32>
    %c0_15 = arith.constant 0 : index
    %c0_16 = arith.constant 0 : index
    %c0_17 = arith.constant 0 : index
    %86 = vector.load %arg2[%c0_15, %c0_16, %c0_17] : memref<8x8x8xf32, #tpu.memory_space<vmem>>, vector<8x8x8xf32>
    %87 = arith.addf %86, %85 : vector<8x8x8xf32>
    %88 = tpu.iota {dimensions = array<i32: 0>} : vector<8x8xi32>
    %89 = tpu.iota {dimensions = array<i32: 1>} : vector<8x8xi32>
    %90 = arith.cmpi sle, %89, %88 : vector<8x8xi32>
    %91 = vector.shape_cast %90 : vector<8x8xi1> to vector<1x8x8xi1>
    %cst_18 = arith.constant 0xFF800000 : f32
    %92 = vector.shape_cast %91 : vector<1x8x8xi1> to vector<1x8x8xi1>
    %93 = vector.broadcast %92 : vector<1x8x8xi1> to vector<8x8x8xi1>
    %94 = vector.broadcast %cst_18 : f32 to vector<8x8x8xf32>
    %95 = arith.select %93, %87, %94 : vector<8x8x8xi1>, vector<8x8x8xf32>
    %cst_19 = arith.constant dense<0xFF800000> : vector<8x8xf32>
    %96 = vector.multi_reduction <maximumf>, %95, %cst_19 [2] : vector<8x8x8xf32> to vector<8x8xf32>
    %97 = vector.shape_cast %96 : vector<8x8xf32> to vector<8x8x1xf32>
    %98 = vector.broadcast %97 : vector<8x8x1xf32> to vector<8x8x8xf32>
    %99 = arith.subf %95, %98 : vector<8x8x8xf32>
    %100 = math.exp %99 : vector<8x8x8xf32>
    %cst_20 = arith.constant dense<0.000000e+00> : vector<8x8xf32>
    %101 = vector.multi_reduction <add>, %100, %cst_20 [2] : vector<8x8x8xf32> to vector<8x8xf32>
    %102 = vector.shape_cast %101 : vector<8x8xf32> to vector<8x8x1xf32>
    %103 = tpu.reciprocal %102 {approx = true} : vector<8x8x1xf32> -> vector<8x8x1xf32>
    %104 = vector.broadcast %103 : vector<8x8x1xf32> to vector<8x8x8xf32>
    %105 = arith.mulf %100, %104 : vector<8x8x8xf32>
    %106 = arith.truncf %105 : vector<8x8x8xf32> to vector<8x8x8xbf16>
    %107 = arith.truncf %82 : vector<8x8x8xf32> to vector<8x8x8xbf16>
    %cst_21 = arith.constant dense<0.000000e+00> : vector<8x8x8xf32>
    %108 = tpu.matmul %106, %107, %cst_21 {dimension_numbers = #tpu.dot_dimension_numbers<[2], [1], [1], [2], [0, 0, 0, 1, 1, 2], [0], [0]>} : vector<8x8x8xbf16>, vector<8x8x8xbf16>, vector<8x8x8xf32> -> vector<8x8x8xf32>
    %109 = vector.extract_strided_slice %108 {offsets = [0, 0, 0], sizes = [1, 8, 8], strides = [1, 1, 1]} : vector<8x8x8xf32> to vector<1x8x8xf32>
    %110 = vector.shape_cast %109 : vector<1x8x8xf32> to vector<8x8xf32>
    %111 = vector.extract_strided_slice %108 {offsets = [1, 0, 0], sizes = [1, 8, 8], strides = [1, 1, 1]} : vector<8x8x8xf32> to vector<1x8x8xf32>
    %112 = vector.shape_cast %111 : vector<1x8x8xf32> to vector<8x8xf32>
    %113 = vector.extract_strided_slice %108 {offsets = [2, 0, 0], sizes = [1, 8, 8], strides = [1, 1, 1]} : vector<8x8x8xf32> to vector<1x8x8xf32>
    %114 = vector.shape_cast %113 : vector<1x8x8xf32> to vector<8x8xf32>
    %115 = vector.extract_strided_slice %108 {offsets = [3, 0, 0], sizes = [1, 8, 8], strides = [1, 1, 1]} : vector<8x8x8xf32> to vector<1x8x8xf32>
    %116 = vector.shape_cast %115 : vector<1x8x8xf32> to vector<8x8xf32>
    %117 = tpu.concatenate %110, %112, %114, %116 in 1 : vector<8x8xf32>, vector<8x8xf32>, vector<8x8xf32>, vector<8x8xf32> -> vector<8x32xf32>
    %118 = vector.extract_strided_slice %108 {offsets = [4, 0, 0], sizes = [1, 8, 8], strides = [1, 1, 1]} : vector<8x8x8xf32> to vector<1x8x8xf32>
    %119 = vector.shape_cast %118 : vector<1x8x8xf32> to vector<8x8xf32>
    %120 = vector.extract_strided_slice %108 {offsets = [5, 0, 0], sizes = [1, 8, 8], strides = [1, 1, 1]} : vector<8x8x8xf32> to vector<1x8x8xf32>
    %121 = vector.shape_cast %120 : vector<1x8x8xf32> to vector<8x8xf32>
    %122 = vector.extract_strided_slice %108 {offsets = [6, 0, 0], sizes = [1, 8, 8], strides = [1, 1, 1]} : vector<8x8x8xf32> to vector<1x8x8xf32>
    %123 = vector.shape_cast %122 : vector<1x8x8xf32> to vector<8x8xf32>
    %124 = vector.extract_strided_slice %108 {offsets = [7, 0, 0], sizes = [1, 8, 8], strides = [1, 1, 1]} : vector<8x8x8xf32> to vector<1x8x8xf32>
    %125 = vector.shape_cast %124 : vector<1x8x8xf32> to vector<8x8xf32>
    %126 = tpu.concatenate %119, %121, %123, %125 in 1 : vector<8x8xf32>, vector<8x8xf32>, vector<8x8xf32>, vector<8x8xf32> -> vector<8x32xf32>
    %127 = tpu.concatenate %117, %126 in 0 : vector<8x32xf32>, vector<8x32xf32> -> vector<16x32xf32>
    %128 = arith.truncf %127 : vector<16x32xf32> to vector<16x32xbf16>
    %c0_22 = arith.constant 0 : index
    %c0_23 = arith.constant 0 : index
    %129 = vector.load %arg9[%c0_22, %c0_23] : memref<32x32xbf16, #tpu.memory_space<vmem>>, vector<32x32xbf16>
    %cst_24 = arith.constant dense<0.000000e+00> : vector<16x32xf32>
    %130 = tpu.matmul %128, %129, %cst_24 {dimension_numbers = #tpu.dot_dimension_numbers<[1], [0], [0], [1], [0, 0, 1, 1], [], []>} : vector<16x32xbf16>, vector<32x32xbf16>, vector<16x32xf32> -> vector<16x32xf32>
    %c0_25 = arith.constant 0 : index
    %c0_26 = arith.constant 0 : index
    %131 = vector.load %arg10[%c0_25, %c0_26] : memref<1x32xf32, #tpu.memory_space<vmem>>, vector<1x32xf32>
    %132 = vector.broadcast %131 : vector<1x32xf32> to vector<16x32xf32>
    %133 = arith.addf %130, %132 : vector<16x32xf32>
    %134 = arith.addf %1, %133 : vector<16x32xf32>
    %c0_27 = arith.constant 0 : index
    %c0_28 = arith.constant 0 : index
    %135 = vector.load %arg5[%c0_27, %c0_28] : memref<1x32xf32, #tpu.memory_space<vmem>>, vector<1x32xf32>
    %c0_29 = arith.constant 0 : index
    %c0_30 = arith.constant 0 : index
    %136 = vector.load %arg6[%c0_29, %c0_30] : memref<1x32xf32, #tpu.memory_space<vmem>>, vector<1x32xf32>
    %cst_31 = arith.constant dense<0.000000e+00> : vector<16xf32>
    %137 = vector.multi_reduction <add>, %134, %cst_31 [1] : vector<16x32xf32> to vector<16xf32>
    %138 = vector.shape_cast %137 : vector<16xf32> to vector<16x1xf32>
    %cst_32 = arith.constant 3.200000e+01 : f32
    %139 = vector.broadcast %cst_32 : f32 to vector<16x1xf32>
    %140 = arith.divf %138, %139 : vector<16x1xf32>
    %141 = vector.broadcast %140 : vector<16x1xf32> to vector<16x32xf32>
    %142 = arith.subf %134, %141 : vector<16x32xf32>
    %143 = arith.mulf %142, %142 : vector<16x32xf32>
    %cst_33 = arith.constant dense<0.000000e+00> : vector<16xf32>
    %144 = vector.multi_reduction <add>, %143, %cst_33 [1] : vector<16x32xf32> to vector<16xf32>
    %145 = vector.shape_cast %144 : vector<16xf32> to vector<16x1xf32>
    %cst_34 = arith.constant 3.200000e+01 : f32
    %146 = vector.broadcast %cst_34 : f32 to vector<16x1xf32>
    %147 = arith.divf %145, %146 : vector<16x1xf32>
    %148 = vector.broadcast %140 : vector<16x1xf32> to vector<16x32xf32>
    %149 = arith.subf %134, %148 : vector<16x32xf32>
    %cst_35 = arith.constant 9.99999974E-6 : f32
    %150 = vector.broadcast %cst_35 : f32 to vector<16x1xf32>
    %151 = arith.addf %147, %150 : vector<16x1xf32>
    %152 = math.rsqrt %151 : vector<16x1xf32>
    %153 = vector.broadcast %152 : vector<16x1xf32> to vector<16x32xf32>
    %154 = arith.mulf %149, %153 : vector<16x32xf32>
    %155 = vector.broadcast %135 : vector<1x32xf32> to vector<16x32xf32>
    %156 = arith.mulf %154, %155 : vector<16x32xf32>
    %157 = vector.broadcast %136 : vector<1x32xf32> to vector<16x32xf32>
    %158 = arith.addf %156, %157 : vector<16x32xf32>
    %159 = arith.truncf %158 : vector<16x32xf32> to vector<16x32xbf16>
    %c0_36 = arith.constant 0 : index
    %c0_37 = arith.constant 0 : index
    %160 = vector.load %arg11[%c0_36, %c0_37] : memref<32x128xbf16, #tpu.memory_space<vmem>>, vector<32x128xbf16>
    %cst_38 = arith.constant dense<0.000000e+00> : vector<16x128xf32>
    %161 = tpu.matmul %159, %160, %cst_38 {dimension_numbers = #tpu.dot_dimension_numbers<[1], [0], [0], [1], [0, 0, 1, 1], [], []>} : vector<16x32xbf16>, vector<32x128xbf16>, vector<16x128xf32> -> vector<16x128xf32>
    %c0_39 = arith.constant 0 : index
    %c0_40 = arith.constant 0 : index
    %162 = vector.load %arg12[%c0_39, %c0_40] : memref<1x128xf32, #tpu.memory_space<vmem>>, vector<1x128xf32>
    %163 = vector.broadcast %162 : vector<1x128xf32> to vector<16x128xf32>
    %164 = arith.addf %161, %163 : vector<16x128xf32>
    %cst_41 = arith.constant 5.000000e-01 : f32
    %165 = vector.broadcast %cst_41 : f32 to vector<16x128xf32>
    %166 = arith.mulf %165, %164 : vector<16x128xf32>
    %cst_42 = arith.constant 0.707106769 : f32
    %167 = vector.broadcast %cst_42 : f32 to vector<16x128xf32>
    %168 = arith.mulf %164, %167 : vector<16x128xf32>
    %169 = math.erf %168 : vector<16x128xf32>
    %cst_43 = arith.constant 1.000000e+00 : f32
    %170 = vector.broadcast %cst_43 : f32 to vector<16x128xf32>
    %171 = arith.addf %170, %169 : vector<16x128xf32>
    %172 = arith.mulf %166, %171 : vector<16x128xf32>
    %173 = arith.truncf %172 : vector<16x128xf32> to vector<16x128xbf16>
    %c0_44 = arith.constant 0 : index
    %c0_45 = arith.constant 0 : index
    %174 = vector.load %arg13[%c0_44, %c0_45] : memref<128x32xbf16, #tpu.memory_space<vmem>>, vector<128x32xbf16>
    %cst_46 = arith.constant dense<0.000000e+00> : vector<16x32xf32>
    %175 = tpu.matmul %173, %174, %cst_46 {dimension_numbers = #tpu.dot_dimension_numbers<[1], [0], [0], [1], [0, 0, 1, 1], [], []>} : vector<16x128xbf16>, vector<128x32xbf16>, vector<16x32xf32> -> vector<16x32xf32>
    %c0_47 = arith.constant 0 : index
    %c0_48 = arith.constant 0 : index
    %176 = vector.load %arg14[%c0_47, %c0_48] : memref<1x32xf32, #tpu.memory_space<vmem>>, vector<1x32xf32>
    %177 = vector.broadcast %176 : vector<1x32xf32> to vector<16x32xf32>
    %178 = arith.addf %175, %177 : vector<16x32xf32>
    %179 = arith.addf %134, %178 : vector<16x32xf32>
    %c0_49 = arith.constant 0 : index
    %c0_50 = arith.constant 0 : index
    %180 = vector.load %arg15[%c0_49, %c0_50] : memref<16x32xf32, #tpu.memory_space<vmem>>, vector<16x32xf32>
    tpu.vector_store %arg15[%c0_49, %c0_50], %179 {strides = array<i32>} : memref<16x32xf32, #tpu.memory_space<vmem>>, vector<16x32xf32>,
    return
  }
  func.func @transform_0(%arg0: i32) -> (i32, i32) {
    %c0_i32 = arith.constant 0 : i32
    %c0_i32_0 = arith.constant 0 : i32
    %c0_i32_1 = arith.constant 0 : i32
    return %c0_i32, %c0_i32_0 : i32, i32
  }
  func.func @transform_1(%arg0: i32) -> (i32, i32, i32) {
    %c0_i32 = arith.constant 0 : i32
    %c0_i32_0 = arith.constant 0 : i32
    %c0_i32_1 = arith.constant 0 : i32
    %c0_i32_2 = arith.constant 0 : i32
    return %c0_i32, %c0_i32_0, %c0_i32_1 : i32, i32, i32
  }
  func.func @transform_2(%arg0: i32) -> (i32, i32) {
    %c0_i32 = arith.constant 0 : i32
    %c0_i32_0 = arith.constant 0 : i32
    %c0_i32_1 = arith.constant 0 : i32
    return %c0_i32, %c0_i32_0 : i32, i32
  }
  func.func @transform_3(%arg0: i32) -> (i32, i32) {
    %c0_i32 = arith.constant 0 : i32
    %c0_i32_0 = arith.constant 0 : i32
    %c0_i32_1 = arith.constant 0 : i32
    return %c0_i32, %c0_i32_0 : i32, i32
  }
  func.func @transform_4(%arg0: i32) -> (i32, i32) {
    %c0_i32 = arith.constant 0 : i32
    %c0_i32_0 = arith.constant 0 : i32
    %c0_i32_1 = arith.constant 0 : i32
    return %c0_i32, %c0_i32_0 : i32, i32
  }
  func.func @transform_5(%arg0: i32) -> (i32, i32) {
    %c0_i32 = arith.constant 0 : i32
    %c0_i32_0 = arith.constant 0 : i32
    %c0_i32_1 = arith.constant 0 : i32
    return %c0_i32, %c0_i32_0 : i32, i32
  }
  func.func @transform_6(%arg0: i32) -> (i32, i32) {
    %c0_i32 = arith.constant 0 : i32
    %c0_i32_0 = arith.constant 0 : i32
    %c0_i32_1 = arith.constant 0 : i32
    return %c0_i32, %c0_i32_0 : i32, i32
  }
  func.func @transform_7(%arg0: i32) -> (i32, i32) {
    %c0_i32 = arith.constant 0 : i32
    %c0_i32_0 = arith.constant 0 : i32
    %c0_i32_1 = arith.constant 0 : i32
    return %c0_i32, %c0_i32_0 : i32, i32
  }
  func.func @transform_8(%arg0: i32) -> (i32, i32) {
    %c0_i32 = arith.constant 0 : i32
    %c0_i32_0 = arith.constant 0 : i32
    %c0_i32_1 = arith.constant 0 : i32
    return %c0_i32, %c0_i32_0 : i32, i32
  }
  func.func @transform_9(%arg0: i32) -> (i32, i32) {
    %c0_i32 = arith.constant 0 : i32
    %c0_i32_0 = arith.constant 0 : i32
    %c0_i32_1 = arith.constant 0 : i32
    return %c0_i32, %c0_i32_0 : i32, i32
  }
  func.func @transform_10(%arg0: i32) -> (i32, i32) {
    %c0_i32 = arith.constant 0 : i32
    %c0_i32_0 = arith.constant 0 : i32
    %c0_i32_1 = arith.constant 0 : i32
    return %c0_i32, %c0_i32_0 : i32, i32
  }
  func.func @transform_11(%arg0: i32) -> (i32, i32) {
    %c0_i32 = arith.constant 0 : i32
    %c0_i32_0 = arith.constant 0 : i32
    %c0_i32_1 = arith.constant 0 : i32
    return %c0_i32, %c0_i32_0 : i32, i32
  }
  func.func @transform_12(%arg0: i32) -> (i32, i32) {
    %c0_i32 = arith.constant 0 : i32
    %c0_i32_0 = arith.constant 0 : i32
    %c0_i32_1 = arith.constant 0 : i32
    return %c0_i32, %c0_i32_0 : i32, i32
  }
  func.func @transform_13(%arg0: i32) -> (i32, i32) {
    %c0_i32 = arith.constant 0 : i32
    %c0_i32_0 = arith.constant 0 : i32
    %c0_i32_1 = arith.constant 0 : i32
    return %c0_i32, %c0_i32_0 : i32, i32
  }
  func.func @transform_14(%arg0: i32) -> (i32, i32) {
    %c0_i32 = arith.constant 0 : i32
    %c0_i32_0 = arith.constant 0 : i32
    %c0_i32_1 = arith.constant 0 : i32
    return %c0_i32, %c0_i32_0 : i32, i32
  }
}

</mosaic_0001>

<llo_original>
// kernel: tpu_custom_call.1
$region0: #{tpu_custom_call.1}
  #allocation0 [shape = 'u32[]', space=smem, size = 0x4, offset = 0x4, fixed_abs, tag = 'smem constant byte address 0x4 - core index']
  #allocation1 [shape = 'u32[144,128]{1,0:T(1,128)}', space=vmem, size = 0x12000, scoped, tag = 'internal scratch']
  %s0 = inlined_call_operand.hbm [shape: f32[32,32], index: 0, kind: input, shape index: {}]
  %s1 = inlined_call_operand.vmem [shape: f32[8,8,8], index: 1, kind: input, shape index: {}]
  %s2 = inlined_call_operand.hbm [shape: f32[1,32], index: 2, kind: input, shape index: {}]
  %s3 = inlined_call_operand.hbm [shape: f32[1,32], index: 3, kind: input, shape index: {}]
  %s4 = inlined_call_operand.hbm [shape: f32[1,32], index: 4, kind: input, shape index: {}]
  %s5 = inlined_call_operand.hbm [shape: f32[1,32], index: 5, kind: input, shape index: {}]
  %s6 = inlined_call_operand.vmem [shape: bf16[32,96], index: 6, kind: input, shape index: {}]
  %s7 = inlined_call_operand.hbm [shape: f32[1,96], index: 7, kind: input, shape index: {}]
  %s8 = inlined_call_operand.hbm [shape: bf16[32,32], index: 8, kind: input, shape index: {}]
  %s9 = inlined_call_operand.hbm [shape: f32[1,32], index: 9, kind: input, shape index: {}]
  %s10 = inlined_call_operand.vmem [shape: bf16[32,128], index: 10, kind: input, shape index: {}]
  %s11 = inlined_call_operand.vmem [shape: f32[1,128], index: 11, kind: input, shape index: {}]
  %s12 = inlined_call_operand.vmem [shape: bf16[128,32], index: 12, kind: input, shape index: {}]
  %s13 = inlined_call_operand.vmem [shape: f32[1,32], index: 13, kind: input, shape index: {}]
  %s14 = inlined_call_operand.hbm [shape: f32[16,32], index: 14, kind: output, shape index: {}]
  %s15 = sld [smem:[#allocation0]]
  $region98: #{tpu_custom_call.1} parent=0
    _
  %s17 = ssub.s32 1, %s15
  %s18 = scalar_select 0, %s17, %s15
  $region1: #{tpu_custom_call.1} parent=0
    #allocation2 [shape = 'u8[16384]{0}', space=vmem, size = 0x4000, scoped, tag = 'input window, operand 0, single buffered']
    #allocation3 [shape = 's32[1]{0}', space=sflag, size = 0x4, scoped, tag = 'scoped memory for tpu_custom_call.1']
    #allocation4 [shape = 's32[1]{0}', space=sflag, size = 0x4, scoped, tag = 'scoped memory for tpu_custom_call.1']
    #allocation5 [shape = 'u8[512]{0}', space=vmem, size = 0x400, scoped, tag = 'input window, operand 2, single buffered']
    #allocation6 [shape = 's32[1]{0}', space=sflag, size = 0x4, scoped, tag = 'scoped memory for tpu_custom_call.1']
    #allocation7 [shape = 'u8[512]{0}', space=vmem, size = 0x400, scoped, tag = 'input window, operand 3, single buffered']
    #allocation8 [shape = 'u8[512]{0}', space=vmem, size = 0x400, scoped, tag = 'input window, operand 4, single buffered']
    #allocation9 [shape = 's32[1]{0}', space=sflag, size = 0x4, scoped, tag = 'scoped memory for tpu_custom_call.1']
    #allocation10 [shape = 'u8[512]{0}', space=vmem, size = 0x400, scoped, tag = 'input window, operand 5, single buffered']
    #allocation11 [shape = 'u8[512]{0}', space=vmem, size = 0x400, scoped, tag = 'input window, operand 7, single buffered']
    #allocation12 [shape = 's32[1]{0}', space=sflag, size = 0x4, scoped, tag = 'scoped memory for tpu_custom_call.1']
    #allocation13 [shape = 'u8[8192]{0}', space=vmem, size = 0x2000, scoped, tag = 'input window, operand 8, single buffered']
    #allocation14 [shape = 'u8[512]{0}', space=vmem, size = 0x400, scoped, tag = 'input window, operand 9, single buffered']
    #allocation15 [shape = 's32[1]{0}', space=sflag, size = 0x4, scoped, tag = 'scoped memory for tpu_custom_call.1']
    #allocation16 [shape = 'u8[8192]{0}', space=vmem, size = 0x2000, scoped, tag = 'output window, operand 0, single buffered']
    %19 = vsyncpa [#allocation3], 0
    %20 = vsyncpa [#allocation6], 0
    %21 = vsyncpa [#allocation9], 0
    %22 = vsyncpa [#allocation12], 0
    %23 = vsyncpa [#allocation15], 0
    %24 = vsyncpa [#allocation4], 0
    // Predicated region
    $region2: #{tpu_custom_call.1} parent=1 // pred_check
      _
    $region3: #{tpu_custom_call.1} parent=1 // pred_check_branch
      %26 = sbr.rel (0) target = $region5
    $region4: #{tpu_custom_call.1} parent=1 // pred_region
      %s28 = ssub.s32 512, 512
      %29 = vsyncadd [#allocation3], %s28
      %s30 = sshll.u32 [#allocation2], 4
      %s31 = int_to_ptr.vmem [resolvable:$true] %s30
      %36 = dma.hbm_to_vmem [thread:$0]  %s0, 512, %s31, [#allocation3], 128, 128, 8
    $region5: #{tpu_custom_call.1} parent=1 // pred_fallthru
      _
    // Predicated region
    $region6: #{tpu_custom_call.1} parent=1 // pred_check
      _
    $region7: #{tpu_custom_call.1} parent=1 // pred_check_branch
      %38 = sbr.rel (0) target = $region9
    $region8: #{tpu_custom_call.1} parent=1 // pred_region
      _
    $region9: #{tpu_custom_call.1} parent=1 // pred_fallthru
      _
    // Predicated region
    $region10: #{tpu_custom_call.1} parent=1 // pred_check
      _
    $region11: #{tpu_custom_call.1} parent=1 // pred_check_branch
      %40 = sbr.rel (0) target = $region13
    $region12: #{tpu_custom_call.1} parent=1 // pred_region
      %s42 = ssub.s32 16, 16
      %43 = vsyncadd [#allocation6], %s42
      %s45 = sshll.u32 [#allocation5], 4
      %s46 = int_to_ptr.vmem [resolvable:$true] %s45
      %48 = dma.hbm_to_vmem [thread:$0]  %s2, 16, %s46, [#allocation6]
    $region13: #{tpu_custom_call.1} parent=1 // pred_fallthru
      _
    // Predicated region
    $region14: #{tpu_custom_call.1} parent=1 // pred_check
      _
    $region15: #{tpu_custom_call.1} parent=1 // pred_check_branch
      %50 = sbr.rel (0) target = $region17
    $region16: #{tpu_custom_call.1} parent=1 // pred_region
      %s52 = ssub.s32 16, 16
      %53 = vsyncadd [#allocation6], %s52
      %s55 = sshll.u32 [#allocation7], 4
      %s56 = int_to_ptr.vmem [resolvable:$true] %s55
      %58 = dma.hbm_to_vmem [thread:$0]  %s3, 16, %s56, [#allocation6]
    $region17: #{tpu_custom_call.1} parent=1 // pred_fallthru
      _
    // Predicated region
    $region18: #{tpu_custom_call.1} parent=1 // pred_check
      _
    $region19: #{tpu_custom_call.1} parent=1 // pred_check_branch
      %60 = sbr.rel (0) target = $region21
    $region20: #{tpu_custom_call.1} parent=1 // pred_region
      %s62 = ssub.s32 16, 16
      %63 = vsyncadd [#allocation9], %s62
      %s65 = sshll.u32 [#allocation8], 4
      %s66 = int_to_ptr.vmem [resolvable:$true] %s65
      %68 = dma.hbm_to_vmem [thread:$0]  %s4, 16, %s66, [#allocation9]
    $region21: #{tpu_custom_call.1} parent=1 // pred_fallthru
      _
    // Predicated region
    $region22: #{tpu_custom_call.1} parent=1 // pred_check
      _
    $region23: #{tpu_custom_call.1} parent=1 // pred_check_branch
      %70 = sbr.rel (0) target = $region25
    $region24: #{tpu_custom_call.1} parent=1 // pred_region
      %s72 = ssub.s32 16, 16
      %73 = vsyncadd [#allocation9], %s72
      %s75 = sshll.u32 [#allocation10], 4
      %s76 = int_to_ptr.vmem [resolvable:$true] %s75
      %78 = dma.hbm_to_vmem [thread:$0]  %s5, 16, %s76, [#allocation9]
    $region25: #{tpu_custom_call.1} parent=1 // pred_fallthru
      _
    // Predicated region
    $region26: #{tpu_custom_call.1} parent=1 // pred_check
      _
    $region27: #{tpu_custom_call.1} parent=1 // pred_check_branch
      %80 = sbr.rel (0) target = $region29
    $region28: #{tpu_custom_call.1} parent=1 // pred_region
      _
    $region29: #{tpu_custom_call.1} parent=1 // pred_fallthru
      _
    // Predicated region
    $region30: #{tpu_custom_call.1} parent=1 // pred_check
      _
    $region31: #{tpu_custom_call.1} parent=1 // pred_check_branch
      %82 = sbr.rel (0) target = $region33
    $region32: #{tpu_custom_call.1} parent=1 // pred_region
      %s84 = ssub.s32 16, 16
      %85 = vsyncadd [#allocation12], %s84
      %s87 = sshll.u32 [#allocation11], 4
      %s88 = int_to_ptr.vmem [resolvable:$true] %s87
      %90 = dma.hbm_to_vmem [thread:$0]  %s7, 16, %s88, [#allocation12]
    $region33: #{tpu_custom_call.1} parent=1 // pred_fallthru
      _
    // Predicated region
    $region34: #{tpu_custom_call.1} parent=1 // pred_check
      _
    $region35: #{tpu_custom_call.1} parent=1 // pred_check_branch
      %92 = sbr.rel (0) target = $region37
    $region36: #{tpu_custom_call.1} parent=1 // pred_region
      %s94 = ssub.s32 256, 256
      %95 = vsyncadd [#allocation12], %s94
      %s96 = sshll.u32 [#allocation13], 4
      %s97 = int_to_ptr.vmem [resolvable:$true] %s96
      %102 = dma.hbm_to_vmem [thread:$0]  %s8, 256, %s97, [#allocation12], 64, 64, 4
    $region37: #{tpu_custom_call.1} parent=1 // pred_fallthru
      _
    // Predicated region
    $region38: #{tpu_custom_call.1} parent=1 // pred_check
      _
    $region39: #{tpu_custom_call.1} parent=1 // pred_check_branch
      %104 = sbr.rel (0) target = $region41
    $region40: #{tpu_custom_call.1} parent=1 // pred_region
      %s106 = ssub.s32 16, 16
      %107 = vsyncadd [#allocation15], %s106
      %s109 = sshll.u32 [#allocation14], 4
      %s110 = int_to_ptr.vmem [resolvable:$true] %s109
      %112 = dma.hbm_to_vmem [thread:$0]  %s9, 16, %s110, [#allocation15]
    $region41: #{tpu_custom_call.1} parent=1 // pred_fallthru
      _
    // Predicated region
    $region42: #{tpu_custom_call.1} parent=1 // pred_check
      _
    $region43: #{tpu_custom_call.1} parent=1 // pred_check_branch
      %114 = sbr.rel (0) target = $region45
    $region44: #{tpu_custom_call.1} parent=1 // pred_region
      _
    $region45: #{tpu_custom_call.1} parent=1 // pred_fallthru
      _
    // Predicated region
    $region46: #{tpu_custom_call.1} parent=1 // pred_check
      _
    $region47: #{tpu_custom_call.1} parent=1 // pred_check_branch
      %116 = sbr.rel (0) target = $region49
    $region48: #{tpu_custom_call.1} parent=1 // pred_region
      _
    $region49: #{tpu_custom_call.1} parent=1 // pred_fallthru
      _
    // Predicated region
    $region50: #{tpu_custom_call.1} parent=1 // pred_check
      _
    $region51: #{tpu_custom_call.1} parent=1 // pred_check_branch
      %118 = sbr.rel (0) target = $region53
    $region52: #{tpu_custom_call.1} parent=1 // pred_region
      _
    $region53: #{tpu_custom_call.1} parent=1 // pred_fallthru
      _
    // Predicated region
    $region54: #{tpu_custom_call.1} parent=1 // pred_check
      _
    $region55: #{tpu_custom_call.1} parent=1 // pred_check_branch
      %120 = sbr.rel (0) target = $region57
    $region56: #{tpu_custom_call.1} parent=1 // pred_region
      _
    $region57: #{tpu_custom_call.1} parent=1 // pred_fallthru
      _
    // Predicated region
    $region58: #{tpu_custom_call.1} parent=1 // pred_check
      _
    $region59: #{tpu_custom_call.1} parent=1 // pred_check_branch
      %122 = sbr.rel (0) target = $region61
    $region60: #{tpu_custom_call.1} parent=1 // pred_region
      %123 = dma.done [#allocation3], 512
    $region61: #{tpu_custom_call.1} parent=1 // pred_fallthru
      _
    // Predicated region
    $region62: #{tpu_custom_call.1} parent=1 // pred_check
      _
    $region63: #{tpu_custom_call.1} parent=1 // pred_check_branch
      %125 = sbr.rel (0) target = $region65
    $region64: #{tpu_custom_call.1} parent=1 // pred_region
      %126 = dma.done [#allocation6], 16
    $region65: #{tpu_custom_call.1} parent=1 // pred_fallthru
      _
    // Predicated region
    $region66: #{tpu_custom_call.1} parent=1 // pred_check
      _
    $region67: #{tpu_custom_call.1} parent=1 // pred_check_branch
      %128 = sbr.rel (0) target = $region69
    $region68: #{tpu_custom_call.1} parent=1 // pred_region
      %129 = dma.done [#allocation6], 16
    $region69: #{tpu_custom_call.1} parent=1 // pred_fallthru
      _
    // Predicated region
    $region70: #{tpu_custom_call.1} parent=1 // pred_check
      _
    $region71: #{tpu_custom_call.1} parent=1 // pred_check_branch
      %131 = sbr.rel (0) target = $region73
    $region72: #{tpu_custom_call.1} parent=1 // pred_region
      %132 = dma.done [#allocation9], 16
    $region73: #{tpu_custom_call.1} parent=1 // pred_fallthru
      _
    // Predicated region
    $region74: #{tpu_custom_call.1} parent=1 // pred_check
      _
    $region75: #{tpu_custom_call.1} parent=1 // pred_check_branch
      %134 = sbr.rel (0) target = $region77
    $region76: #{tpu_custom_call.1} parent=1 // pred_region
      %135 = dma.done [#allocation9], 16
    $region77: #{tpu_custom_call.1} parent=1 // pred_fallthru
      _
    // Predicated region
    $region78: #{tpu_custom_call.1} parent=1 // pred_check
      _
    $region79: #{tpu_custom_call.1} parent=1 // pred_check_branch
      %137 = sbr.rel (0) target = $region81
    $region80: #{tpu_custom_call.1} parent=1 // pred_region
      %138 = dma.done [#allocation12], 16
    $region81: #{tpu_custom_call.1} parent=1 // pred_fallthru
      _
    // Predicated region
    $region82: #{tpu_custom_call.1} parent=1 // pred_check
      _
    $region83: #{tpu_custom_call.1} parent=1 // pred_check_branch
      %140 = sbr.rel (0) target = $region85
    $region84: #{tpu_custom_call.1} parent=1 // pred_region
      %141 = dma.done [#allocation12], 256
    $region85: #{tpu_custom_call.1} parent=1 // pred_fallthru
      _
    // Predicated region
    $region86: #{tpu_custom_call.1} parent=1 // pred_check
      _
    $region87: #{tpu_custom_call.1} parent=1 // pred_check_branch
      %143 = sbr.rel (0) target = $region89
    $region88: #{tpu_custom_call.1} parent=1 // pred_region
      %144 = dma.done [#allocation15], 16
    $region89: #{tpu_custom_call.1} parent=1 // pred_fallthru
      _
    %v146 = vld [vmem:[#allocation2] sm:$0xff]
    %v147 = vld [vmem:[#allocation2 + $0x8] sm:$0xff]
    %v148 = vld [vmem:[#allocation2 + $0x10] sm:$0xff]
    %v149 = vld [vmem:[#allocation2 + $0x18] sm:$0xff]
    %v150 = vld [vmem:[#allocation5] sm:$0x1]
    %v151 = vld [vmem:[#allocation7] sm:$0x1]
    %vm152 = vcmask 261120
    %v153 = vsel %vm152, %v146, 0.0
    %154 = vadd.xlane.f32.xlu0 %v153
    %v155 = vpop.xlane.xlu0 %154
    %v156 = vsel %vm152, %v147, 0.0
    %157 = vadd.xlane.f32.xlu0 %v156
    %v158 = vpop.xlane.xlu0 %157
    %v159 = vsel %vm152, %v148, 0.0
    %160 = vadd.xlane.f32.xlu0 %v159
    %v161 = vpop.xlane.xlu0 %160
    %v162 = vsel %vm152, %v149, 0.0
    %163 = vadd.xlane.f32.xlu0 %v162
    %v164 = vpop.xlane.xlu0 %163
    %v165 = vrcp.pop 32.0
    %v166 = vmul.f32 %v155, %v165
    %v167 = vmul.f32 %v158, %v165
    %v168 = vmul.f32 %v161, %v165
    %v169 = vmul.f32 %v164, %v165
    %v170 = vsub.f32 %v146, %v166
    %v171 = vsub.f32 %v147, %v167
    %v172 = vsub.f32 %v148, %v168
    %v173 = vsub.f32 %v149, %v169
    %v174 = vmul.f32 %v170, %v170
    %v175 = vmul.f32 %v171, %v171
    %v176 = vmul.f32 %v172, %v172
    %v177 = vmul.f32 %v173, %v173
    %v178 = vsel %vm152, %v174, 0.0
    %179 = vadd.xlane.f32.xlu0 %v178
    %v180 = vpop.xlane.xlu0 %179
    %v181 = vsel %vm152, %v175, 0.0
    %182 = vadd.xlane.f32.xlu0 %v181
    %v183 = vpop.xlane.xlu0 %182
    %v184 = vsel %vm152, %v176, 0.0
    %185 = vadd.xlane.f32.xlu0 %v184
    %v186 = vpop.xlane.xlu0 %185
    %v187 = vsel %vm152, %v177, 0.0
    %188 = vadd.xlane.f32.xlu0 %v187
    %v189 = vpop.xlane.xlu0 %188
    %v190 = vmul.f32 %v180, %v165
    %v191 = vmul.f32 %v183, %v165
    %v192 = vmul.f32 %v186, %v165
    %v193 = vmul.f32 %v189, %v165
    %v194 = vadd.f32 %v190, 1e-05
    %v195 = vadd.f32 %v191, 1e-05
    %v196 = vadd.f32 %v192, 1e-05
    %v197 = vadd.f32 %v193, 1e-05
    %v198 = vrsqrt.pop %v194
    %v199 = vrsqrt.pop %v195
    %v200 = vrsqrt.pop %v196
    %v201 = vrsqrt.pop %v197
    %v202 = vmul.f32 %v170, %v198
    %v203 = vmul.f32 %v171, %v199
    %v204 = vmul.f32 %v172, %v200
    %v205 = vmul.f32 %v173, %v201
    %v207 = vlaneseq
    %v208 = vshrl.u32 %v207, 7
    %v209 = vsub.s32 0, %v208
    %v210 = vrot.slane %v150, %v209
    %v212 = vmul.f32 %v202, %v210
    %v213 = vmul.f32 %v203, %v210
    %v214 = vmul.f32 %v204, %v210
    %v215 = vmul.f32 %v205, %v210
    %v217 = vlaneseq
    %v218 = vshrl.u32 %v217, 7
    %v219 = vsub.s32 0, %v218
    %v220 = vrot.slane %v151, %v219
    %v222 = vadd.f32 %v212, %v220
    %v223 = vadd.f32 %v213, %v220
    %v224 = vadd.f32 %v214, %v220
    %v225 = vadd.f32 %v215, %v220
    %v226 = vpack.c.bf16 %v223, %v222
    %v227 = vpack.c.bf16 %v225, %v224
    %v228 = vld [vmem:[%s6] sm:$0xf]
    %v229 = vld [vmem:[%s6 + $0x4] sm:$0xf]
    %v230 = vld [vmem:[%s6 + $0x8] sm:$0xf]
    %v231 = vld [vmem:[%s6 + $0xc] sm:$0xf]
    %v232 = vld [vmem:[#allocation11] sm:$0x1]
    %v234 = vlaneseq
    %v235 = vshrl.u32 %v234, 7
    %v236 = vsub.s32 0, %v235
    %v237 = vrot.slane %v232, %v236
    %v243 = vunpack.c.l.b16 %v228
    %v244 = vunpack.c.l.b16 %v229
    %v245 = vunpack.c.l.b16 %v230
    %v246 = vunpack.c.l.b16 %v231
    %v247 = vpack.c.b16 %v244, %v243
    %v248 = vpack.c.b16 %v246, %v245
    %v252 = vsel %vm152, %v226, 0
    %v255 = vsel %vm152, %v227, 0
    %257 = vmatprep.subr.bf16.mxu0 0
    %258 = vmatpush1.bf16.msra.mxu0 0
    %259 = vmatprep.subr.bf16.mxu0 0
    %260 = vmatpush1.bf16.msra.mxu0 0
    %261 = vmatprep.subr.bf16.mxu0 0
    %262 = vmatpush1.bf16.msra.mxu0 0
    %263 = vmatprep.subr.bf16.mxu0 0
    %264 = vmatpush1.bf16.msra.mxu0 0
    %265 = vmatprep.subr.bf16.mxu0 0
    %266 = vmatpush1.bf16.msra.mxu0 0
    %267 = vmatprep.subr.bf16.mxu0 0
    %268 = vmatpush1.bf16.msra.mxu0 0
    %269 = vmatprep.subr.bf16.mxu0 0
    %270 = vmatpush1.bf16.msra.mxu0 %v248
    %271 = vmatprep.subr.bf16.mxu0 0
    %272 = vmatpush1.bf16.msra.mxu0 %v247
    %273 = vmatprep.subr.bf16.mxu0 0
    %274 = vmatpush2.bf16.msra.mxu0 0
    %275 = vmatprep.subr.bf16.mxu0 0
    %276 = vmatpush2.bf16.msra.mxu0 0
    %277 = vmatprep.subr.bf16.mxu0 0
    %278 = vmatpush2.bf16.msra.mxu0 0
    %279 = vmatprep.subr.bf16.mxu0 0
    %280 = vmatpush2.bf16.msra.mxu0 0
    %281 = vmatprep.subr.bf16.mxu0 0
    %282 = vmatpush2.bf16.msra.mxu0 0
    %283 = vmatprep.subr.bf16.mxu0 0
    %284 = vmatpush2.bf16.msra.mxu0 0
    %285 = vmatprep.subr.bf16.mxu0 0
    %286 = vmatpush2.bf16.msra.mxu0 0
    %287 = vmatprep.subr.bf16.mxu0 0
    %288 = vmatpush2.bf16.msra.mxu0 0
    %289 = vmatprep.mubr.bf16.mxu0 0
    %290 = vmatmul.mubr.bf16.gmra.mxu0 %v252
    %v291 = vpop.f32.mrf.mxu0
    %v292 = vadd.f32 %v237, %v291
    %v293 = vpop.f32.mrf.mxu0
    %v294 = vpop.f32.mrf.mxu0
    %v295 = vadd.f32 %v237, %v294
    %v296 = vpop.f32.mrf.mxu0
    %297 = vmatprep.mubr.bf16.mxu0 0
    %298 = vmatmul.mubr.bf16.gmra.mxu0 %v255
    %v299 = vpop.f32.mrf.mxu0
    %v300 = vadd.f32 %v237, %v299
    %v301 = vpop.f32.mrf.mxu0
    %v302 = vpop.f32.mrf.mxu0
    %v303 = vadd.f32 %v237, %v302
    %v304 = vpop.f32.mrf.mxu0
    %305 = vdwg.mxu0
    %307 = vrot.lane.b32.xlu0 %v292, 120
    %v308 = vpop.permute.xlu0 %307
    %310 = vrot.lane.b32.xlu0 %v292, 112
    %v311 = vpop.permute.xlu0 %310
    %313 = vrot.lane.b32.xlu0 %v292, 104
    %v314 = vpop.permute.xlu0 %313
    %317 = vrot.lane.b32.xlu0 %v295, 120
    %v318 = vpop.permute.xlu0 %317
    %320 = vrot.lane.b32.xlu0 %v295, 112
    %v321 = vpop.permute.xlu0 %320
    %323 = vrot.lane.b32.xlu0 %v295, 104
    %v324 = vpop.permute.xlu0 %323
    %327 = vrot.lane.b32.xlu0 %v300, 120
    %v328 = vpop.permute.xlu0 %327
    %330 = vrot.lane.b32.xlu0 %v300, 112
    %v331 = vpop.permute.xlu0 %330
    %333 = vrot.lane.b32.xlu0 %v300, 104
    %v334 = vpop.permute.xlu0 %333
    %337 = vrot.lane.b32.xlu0 %v303, 120
    %v338 = vpop.permute.xlu0 %337
    %340 = vrot.lane.b32.xlu0 %v303, 112
    %v341 = vpop.permute.xlu0 %340
    %343 = vrot.lane.b32.xlu0 %v303, 104
    %v344 = vpop.permute.xlu0 %343
    %v346 = vpack.c.bf16 %v292, %v292
    %v347 = vpack.c.bf16 %v308, %v308
    %v348 = vpack.c.bf16 %v311, %v311
    %v349 = vpack.c.bf16 %v314, %v314
    %v350 = vpack.c.bf16 %v295, %v295
    %v351 = vpack.c.bf16 %v318, %v318
    %v352 = vpack.c.bf16 %v321, %v321
    %v353 = vpack.c.bf16 %v324, %v324
    %v354 = vpack.c.bf16 %v300, %v300
    %v355 = vpack.c.bf16 %v328, %v328
    %v356 = vpack.c.bf16 %v331, %v331
    %v357 = vpack.c.bf16 %v334, %v334
    %v358 = vpack.c.bf16 %v303, %v303
    %v359 = vpack.c.bf16 %v338, %v338
    %v360 = vpack.c.bf16 %v341, %v341
    %v361 = vpack.c.bf16 %v344, %v344
    %363 = vrot.lane.b32.xlu0 %v354, 96
    %v364 = vpop.permute.xlu0 %363
    %vm365 = vcmask 64512
    %v367 = vsel %vm365, %v346, 0
    %v370 = vsel %vm365, %v364, 0
    %372 = vmatprep.subr.bf16.mxu0 0
    %373 = vmatpush1.bf16.xpose.msra.mxu0 0
    %374 = vmatprep.subr.bf16.mxu0 0
    %375 = vmatpush1.bf16.xpose.msra.mxu0 0
    %376 = vmatprep.subr.bf16.mxu0 0
    %377 = vmatpush1.bf16.xpose.msra.mxu0 0
    %378 = vmatprep.subr.bf16.mxu0 0
    %379 = vmatpush1.bf16.xpose.msra.mxu0 0
    %380 = vmatprep.subr.bf16.mxu0 0
    %381 = vmatpush1.bf16.xpose.msra.mxu0 0
    %382 = vmatprep.subr.bf16.mxu0 0
    %383 = vmatpush1.bf16.xpose.msra.mxu0 0
    %384 = vmatprep.subr.bf16.mxu0 0
    %385 = vmatpush1.bf16.xpose.msra.mxu0 0
    %386 = vmatprep.subr.bf16.mxu0 0
    %387 = vmatpush1.bf16.xpose.msra.mxu0 %v370
    %388 = vmatprep.subr.bf16.mxu0 0
    %389 = vmatpush2.bf16.xpose.msra.mxu0 0
    %390 = vmatprep.subr.bf16.mxu0 0
    %391 = vmatpush2.bf16.xpose.msra.mxu0 0
    %392 = vmatprep.subr.bf16.mxu0 0
    %393 = vmatpush2.bf16.xpose.msra.mxu0 0
    %394 = vmatprep.subr.bf16.mxu0 0
    %395 = vmatpush2.bf16.xpose.msra.mxu0 0
    %396 = vmatprep.subr.bf16.mxu0 0
    %397 = vmatpush2.bf16.xpose.msra.mxu0 0
    %398 = vmatprep.subr.bf16.mxu0 0
    %399 = vmatpush2.bf16.xpose.msra.mxu0 0
    %400 = vmatprep.subr.bf16.mxu0 0
    %401 = vmatpush2.bf16.xpose.msra.mxu0 0
    %402 = vmatprep.subr.bf16.mxu0 0
    %403 = vmatpush2.bf16.xpose.msra.mxu0 0
    %404 = vmatprep.mubr.bf16.mxu0 0
    %405 = vmatmul.mubr.bf16.gmra.mxu0 %v367
    %v406 = vpop.f32.mrf.mxu0
    %v407 = vadd.f32 0.0, %v406
    %v408 = vpop.f32.mrf.mxu0
    %v409 = vpop.f32.mrf.mxu0
    %v410 = vpop.f32.mrf.mxu0
    %411 = vdwg.mxu0
    %413 = vrot.lane.b32.xlu0 %v355, 96
    %v414 = vpop.permute.xlu0 %413
    %v416 = vsel %vm365, %v347, 0
    %v419 = vsel %vm365, %v414, 0
    %421 = vmatprep.subr.bf16.mxu0 0
    %422 = vmatpush1.bf16.xpose.msra.mxu0 0
    %423 = vmatprep.subr.bf16.mxu0 0
    %424 = vmatpush1.bf16.xpose.msra.mxu0 0
    %425 = vmatprep.subr.bf16.mxu0 0
    %426 = vmatpush1.bf16.xpose.msra.mxu0 0
    %427 = vmatprep.subr.bf16.mxu0 0
    %428 = vmatpush1.bf16.xpose.msra.mxu0 0
    %429 = vmatprep.subr.bf16.mxu0 0
    %430 = vmatpush1.bf16.xpose.msra.mxu0 0
    %431 = vmatprep.subr.bf16.mxu0 0
    %432 = vmatpush1.bf16.xpose.msra.mxu0 0
    %433 = vmatprep.subr.bf16.mxu0 0
    %434 = vmatpush1.bf16.xpose.msra.mxu0 0
    %435 = vmatprep.subr.bf16.mxu0 0
    %436 = vmatpush1.bf16.xpose.msra.mxu0 %v419
    %437 = vmatprep.subr.bf16.mxu0 0
    %438 = vmatpush2.bf16.xpose.msra.mxu0 0
    %439 = vmatprep.subr.bf16.mxu0 0
    %440 = vmatpush2.bf16.xpose.msra.mxu0 0
    %441 = vmatprep.subr.bf16.mxu0 0
    %442 = vmatpush2.bf16.xpose.msra.mxu0 0
    %443 = vmatprep.subr.bf16.mxu0 0
    %444 = vmatpush2.bf16.xpose.msra.mxu0 0
    %445 = vmatprep.subr.bf16.mxu0 0
    %446 = vmatpush2.bf16.xpose.msra.mxu0 0
    %447 = vmatprep.subr.bf16.mxu0 0
    %448 = vmatpush2.bf16.xpose.msra.mxu0 0
    %449 = vmatprep.subr.bf16.mxu0 0
    %450 = vmatpush2.bf16.xpose.msra.mxu0 0
    %451 = vmatprep.subr.bf16.mxu0 0
    %452 = vmatpush2.bf16.xpose.msra.mxu0 0
    %453 = vmatprep.mubr.bf16.mxu0 0
    %454 = vmatmul.mubr.bf16.gmra.mxu0 %v416
    %v455 = vpop.f32.mrf.mxu0
    %v456 = vadd.f32 0.0, %v455
    %v457 = vpop.f32.mrf.mxu0
    %v458 = vpop.f32.mrf.mxu0
    %v459 = vpop.f32.mrf.mxu0
    %460 = vdwg.mxu0
    %462 = vrot.lane.b32.xlu0 %v356, 96
    %v463 = vpop.permute.xlu0 %462
    %v465 = vsel %vm365, %v348, 0
    %v468 = vsel %vm365, %v463, 0
    %470 = vmatprep.subr.bf16.mxu0 0
    %471 = vmatpush1.bf16.xpose.msra.mxu0 0
    %472 = vmatprep.subr.bf16.mxu0 0
    %473 = vmatpush1.bf16.xpose.msra.mxu0 0
    %474 = vmatprep.subr.bf16.mxu0 0
    %475 = vmatpush1.bf16.xpose.msra.mxu0 0
    %476 = vmatprep.subr.bf16.mxu0 0
    %477 = vmatpush1.bf16.xpose.msra.mxu0 0
    %478 = vmatprep.subr.bf16.mxu0 0
    %479 = vmatpush1.bf16.xpose.msra.mxu0 0
    %480 = vmatprep.subr.bf16.mxu0 0
    %481 = vmatpush1.bf16.xpose.msra.mxu0 0
    %482 = vmatprep.subr.bf16.mxu0 0
    %483 = vmatpush1.bf16.xpose.msra.mxu0 0
    %484 = vmatprep.subr.bf16.mxu0 0
    %485 = vmatpush1.bf16.xpose.msra.mxu0 %v468
    %486 = vmatprep.subr.bf16.mxu0 0
    %487 = vmatpush2.bf16.xpose.msra.mxu0 0
    %488 = vmatprep.subr.bf16.mxu0 0
    %489 = vmatpush2.bf16.xpose.msra.mxu0 0
    %490 = vmatprep.subr.bf16.mxu0 0
    %491 = vmatpush2.bf16.xpose.msra.mxu0 0
    %492 = vmatprep.subr.bf16.mxu0 0
    %493 = vmatpush2.bf16.xpose.msra.mxu0 0
    %494 = vmatprep.subr.bf16.mxu0 0
    %495 = vmatpush2.bf16.xpose.msra.mxu0 0
    %496 = vmatprep.subr.bf16.mxu0 0
    %497 = vmatpush2.bf16.xpose.msra.mxu0 0
    %498 = vmatprep.subr.bf16.mxu0 0
    %499 = vmatpush2.bf16.xpose.msra.mxu0 0
    %500 = vmatprep.subr.bf16.mxu0 0
    %501 = vmatpush2.bf16.xpose.msra.mxu0 0
    %502 = vmatprep.mubr.bf16.mxu0 0
    %503 = vmatmul.mubr.bf16.gmra.mxu0 %v465
    %v504 = vpop.f32.mrf.mxu0
    %v505 = vadd.f32 0.0, %v504
    %v506 = vpop.f32.mrf.mxu0
    %v507 = vpop.f32.mrf.mxu0
    %v508 = vpop.f32.mrf.mxu0
    %509 = vdwg.mxu0
    %511 = vrot.lane.b32.xlu0 %v357, 96
    %v512 = vpop.permute.xlu0 %511
    %v514 = vsel %vm365, %v349, 0
    %v517 = vsel %vm365, %v512, 0
    %519 = vmatprep.subr.bf16.mxu0 0
    %520 = vmatpush1.bf16.xpose.msra.mxu0 0
    %521 = vmatprep.subr.bf16.mxu0 0
    %522 = vmatpush1.bf16.xpose.msra.mxu0 0
    %523 = vmatprep.subr.bf16.mxu0 0
    %524 = vmatpush1.bf16.xpose.msra.mxu0 0
    %525 = vmatprep.subr.bf16.mxu0 0
    %526 = vmatpush1.bf16.xpose.msra.mxu0 0
    %527 = vmatprep.subr.bf16.mxu0 0
    %528 = vmatpush1.bf16.xpose.msra.mxu0 0
    %529 = vmatprep.subr.bf16.mxu0 0
    %530 = vmatpush1.bf16.xpose.msra.mxu0 0
    %531 = vmatprep.subr.bf16.mxu0 0
    %532 = vmatpush1.bf16.xpose.msra.mxu0 0
    %533 = vmatprep.subr.bf16.mxu0 0
    %534 = vmatpush1.bf16.xpose.msra.mxu0 %v517
    %535 = vmatprep.subr.bf16.mxu0 0
    %536 = vmatpush2.bf16.xpose.msra.mxu0 0
    %537 = vmatprep.subr.bf16.mxu0 0
    %538 = vmatpush2.bf16.xpose.msra.mxu0 0
    %539 = vmatprep.subr.bf16.mxu0 0
    %540 = vmatpush2.bf16.xpose.msra.mxu0 0
    %541 = vmatprep.subr.bf16.mxu0 0
    %542 = vmatpush2.bf16.xpose.msra.mxu0 0
    %543 = vmatprep.subr.bf16.mxu0 0
    %544 = vmatpush2.bf16.xpose.msra.mxu0 0
    %545 = vmatprep.subr.bf16.mxu0 0
    %546 = vmatpush2.bf16.xpose.msra.mxu0 0
    %547 = vmatprep.subr.bf16.mxu0 0
    %548 = vmatpush2.bf16.xpose.msra.mxu0 0
    %549 = vmatprep.subr.bf16.mxu0 0
    %550 = vmatpush2.bf16.xpose.msra.mxu0 0
    %551 = vmatprep.mubr.bf16.mxu0 0
    %552 = vmatmul.mubr.bf16.gmra.mxu0 %v514
    %v553 = vpop.f32.mrf.mxu0
    %v554 = vadd.f32 0.0, %v553
    %v555 = vpop.f32.mrf.mxu0
    %v556 = vpop.f32.mrf.mxu0
    %v557 = vpop.f32.mrf.mxu0
    %558 = vdwg.mxu0
    %560 = vrot.lane.b32.xlu0 %v358, 96
    %v561 = vpop.permute.xlu0 %560
    %v563 = vsel %vm365, %v350, 0
    %v566 = vsel %vm365, %v561, 0
    %568 = vmatprep.subr.bf16.mxu0 0
    %569 = vmatpush1.bf16.xpose.msra.mxu0 0
    %570 = vmatprep.subr.bf16.mxu0 0
    %571 = vmatpush1.bf16.xpose.msra.mxu0 0
    %572 = vmatprep.subr.bf16.mxu0 0
    %573 = vmatpush1.bf16.xpose.msra.mxu0 0
    %574 = vmatprep.subr.bf16.mxu0 0
    %575 = vmatpush1.bf16.xpose.msra.mxu0 0
    %576 = vmatprep.subr.bf16.mxu0 0
    %577 = vmatpush1.bf16.xpose.msra.mxu0 0
    %578 = vmatprep.subr.bf16.mxu0 0
    %579 = vmatpush1.bf16.xpose.msra.mxu0 0
    %580 = vmatprep.subr.bf16.mxu0 0
    %581 = vmatpush1.bf16.xpose.msra.mxu0 0
    %582 = vmatprep.subr.bf16.mxu0 0
    %583 = vmatpush1.bf16.xpose.msra.mxu0 %v566
    %584 = vmatprep.subr.bf16.mxu0 0
    %585 = vmatpush2.bf16.xpose.msra.mxu0 0
    %586 = vmatprep.subr.bf16.mxu0 0
    %587 = vmatpush2.bf16.xpose.msra.mxu0 0
    %588 = vmatprep.subr.bf16.mxu0 0
    %589 = vmatpush2.bf16.xpose.msra.mxu0 0
    %590 = vmatprep.subr.bf16.mxu0 0
    %591 = vmatpush2.bf16.xpose.msra.mxu0 0
    %592 = vmatprep.subr.bf16.mxu0 0
    %593 = vmatpush2.bf16.xpose.msra.mxu0 0
    %594 = vmatprep.subr.bf16.mxu0 0
    %595 = vmatpush2.bf16.xpose.msra.mxu0 0
    %596 = vmatprep.subr.bf16.mxu0 0
    %597 = vmatpush2.bf16.xpose.msra.mxu0 0
    %598 = vmatprep.subr.bf16.mxu0 0
    %599 = vmatpush2.bf16.xpose.msra.mxu0 0
    %600 = vmatprep.mubr.bf16.mxu0 0
    %601 = vmatmul.mubr.bf16.gmra.mxu0 %v563
    %v602 = vpop.f32.mrf.mxu0
    %v603 = vadd.f32 0.0, %v602
    %v604 = vpop.f32.mrf.mxu0
    %v605 = vpop.f32.mrf.mxu0
    %v606 = vpop.f32.mrf.mxu0
    %607 = vdwg.mxu0
    %609 = vrot.lane.b32.xlu0 %v359, 96
    %v610 = vpop.permute.xlu0 %609
    %v612 = vsel %vm365, %v351, 0
    %v615 = vsel %vm365, %v610, 0
    %617 = vmatprep.subr.bf16.mxu0 0
    %618 = vmatpush1.bf16.xpose.msra.mxu0 0
    %619 = vmatprep.subr.bf16.mxu0 0
    %620 = vmatpush1.bf16.xpose.msra.mxu0 0
    %621 = vmatprep.subr.bf16.mxu0 0
    %622 = vmatpush1.bf16.xpose.msra.mxu0 0
    %623 = vmatprep.subr.bf16.mxu0 0
    %624 = vmatpush1.bf16.xpose.msra.mxu0 0
    %625 = vmatprep.subr.bf16.mxu0 0
    %626 = vmatpush1.bf16.xpose.msra.mxu0 0
    %627 = vmatprep.subr.bf16.mxu0 0
    %628 = vmatpush1.bf16.xpose.msra.mxu0 0
    %629 = vmatprep.subr.bf16.mxu0 0
    %630 = vmatpush1.bf16.xpose.msra.mxu0 0
    %631 = vmatprep.subr.bf16.mxu0 0
    %632 = vmatpush1.bf16.xpose.msra.mxu0 %v615
    %633 = vmatprep.subr.bf16.mxu0 0
    %634 = vmatpush2.bf16.xpose.msra.mxu0 0
    %635 = vmatprep.subr.bf16.mxu0 0
    %636 = vmatpush2.bf16.xpose.msra.mxu0 0
    %637 = vmatprep.subr.bf16.mxu0 0
    %638 = vmatpush2.bf16.xpose.msra.mxu0 0
    %639 = vmatprep.subr.bf16.mxu0 0
    %640 = vmatpush2.bf16.xpose.msra.mxu0 0
    %641 = vmatprep.subr.bf16.mxu0 0
    %642 = vmatpush2.bf16.xpose.msra.mxu0 0
    %643 = vmatprep.subr.bf16.mxu0 0
    %644 = vmatpush2.bf16.xpose.msra.mxu0 0
    %645 = vmatprep.subr.bf16.mxu0 0
    %646 = vmatpush2.bf16.xpose.msra.mxu0 0
    %647 = vmatprep.subr.bf16.mxu0 0
    %648 = vmatpush2.bf16.xpose.msra.mxu0 0
    %649 = vmatprep.mubr.bf16.mxu0 0
    %650 = vmatmul.mubr.bf16.gmra.mxu0 %v612
    %v651 = vpop.f32.mrf.mxu0
    %v652 = vadd.f32 0.0, %v651
    %v653 = vpop.f32.mrf.mxu0
    %v654 = vpop.f32.mrf.mxu0
    %v655 = vpop.f32.mrf.mxu0
    %656 = vdwg.mxu0
    %658 = vrot.lane.b32.xlu0 %v360, 96
    %v659 = vpop.permute.xlu0 %658
    %v661 = vsel %vm365, %v352, 0
    %v664 = vsel %vm365, %v659, 0
    %666 = vmatprep.subr.bf16.mxu0 0
    %667 = vmatpush1.bf16.xpose.msra.mxu0 0
    %668 = vmatprep.subr.bf16.mxu0 0
    %669 = vmatpush1.bf16.xpose.msra.mxu0 0
    %670 = vmatprep.subr.bf16.mxu0 0
    %671 = vmatpush1.bf16.xpose.msra.mxu0 0
    %672 = vmatprep.subr.bf16.mxu0 0
    %673 = vmatpush1.bf16.xpose.msra.mxu0 0
    %674 = vmatprep.subr.bf16.mxu0 0
    %675 = vmatpush1.bf16.xpose.msra.mxu0 0
    %676 = vmatprep.subr.bf16.mxu0 0
    %677 = vmatpush1.bf16.xpose.msra.mxu0 0
    %678 = vmatprep.subr.bf16.mxu0 0
    %679 = vmatpush1.bf16.xpose.msra.mxu0 0
    %680 = vmatprep.subr.bf16.mxu0 0
    %681 = vmatpush1.bf16.xpose.msra.mxu0 %v664
    %682 = vmatprep.subr.bf16.mxu0 0
    %683 = vmatpush2.bf16.xpose.msra.mxu0 0
    %684 = vmatprep.subr.bf16.mxu0 0
    %685 = vmatpush2.bf16.xpose.msra.mxu0 0
    %686 = vmatprep.subr.bf16.mxu0 0
    %687 = vmatpush2.bf16.xpose.msra.mxu0 0
    %688 = vmatprep.subr.bf16.mxu0 0
    %689 = vmatpush2.bf16.xpose.msra.mxu0 0
    %690 = vmatprep.subr.bf16.mxu0 0
    %691 = vmatpush2.bf16.xpose.msra.mxu0 0
    %692 = vmatprep.subr.bf16.mxu0 0
    %693 = vmatpush2.bf16.xpose.msra.mxu0 0
    %694 = vmatprep.subr.bf16.mxu0 0
    %695 = vmatpush2.bf16.xpose.msra.mxu0 0
    %696 = vmatprep.subr.bf16.mxu0 0
    %697 = vmatpush2.bf16.xpose.msra.mxu0 0
    %698 = vmatprep.mubr.bf16.mxu0 0
    %699 = vmatmul.mubr.bf16.gmra.mxu0 %v661
    %v700 = vpop.f32.mrf.mxu0
    %v701 = vadd.f32 0.0, %v700
    %v702 = vpop.f32.mrf.mxu0
    %v703 = vpop.f32.mrf.mxu0
    %v704 = vpop.f32.mrf.mxu0
    %705 = vdwg.mxu0
    %707 = vrot.lane.b32.xlu0 %v361, 96
    %v708 = vpop.permute.xlu0 %707
    %v710 = vsel %vm365, %v353, 0
    %v713 = vsel %vm365, %v708, 0
    %715 = vmatprep.subr.bf16.mxu0 0
    %716 = vmatpush1.bf16.xpose.msra.mxu0 0
    %717 = vmatprep.subr.bf16.mxu0 0
    %718 = vmatpush1.bf16.xpose.msra.mxu0 0
    %719 = vmatprep.subr.bf16.mxu0 0
    %720 = vmatpush1.bf16.xpose.msra.mxu0 0
    %721 = vmatprep.subr.bf16.mxu0 0
    %722 = vmatpush1.bf16.xpose.msra.mxu0 0
    %723 = vmatprep.subr.bf16.mxu0 0
    %724 = vmatpush1.bf16.xpose.msra.mxu0 0
    %725 = vmatprep.subr.bf16.mxu0 0
    %726 = vmatpush1.bf16.xpose.msra.mxu0 0
    %727 = vmatprep.subr.bf16.mxu0 0
    %728 = vmatpush1.bf16.xpose.msra.mxu0 0
    %729 = vmatprep.subr.bf16.mxu0 0
    %730 = vmatpush1.bf16.xpose.msra.mxu0 %v713
    %731 = vmatprep.subr.bf16.mxu0 0
    %732 = vmatpush2.bf16.xpose.msra.mxu0 0
    %733 = vmatprep.subr.bf16.mxu0 0
    %734 = vmatpush2.bf16.xpose.msra.mxu0 0
    %735 = vmatprep.subr.bf16.mxu0 0
    %736 = vmatpush2.bf16.xpose.msra.mxu0 0
    %737 = vmatprep.subr.bf16.mxu0 0
    %738 = vmatpush2.bf16.xpose.msra.mxu0 0
    %739 = vmatprep.subr.bf16.mxu0 0
    %740 = vmatpush2.bf16.xpose.msra.mxu0 0
    %741 = vmatprep.subr.bf16.mxu0 0
    %742 = vmatpush2.bf16.xpose.msra.mxu0 0
    %743 = vmatprep.subr.bf16.mxu0 0
    %744 = vmatpush2.bf16.xpose.msra.mxu0 0
    %745 = vmatprep.subr.bf16.mxu0 0
    %746 = vmatpush2.bf16.xpose.msra.mxu0 0
    %747 = vmatprep.mubr.bf16.mxu0 0
    %748 = vmatmul.mubr.bf16.gmra.mxu0 %v710
    %v749 = vpop.f32.mrf.mxu0
    %v750 = vadd.f32 0.0, %v749
    %v751 = vpop.f32.mrf.mxu0
    %v752 = vpop.f32.mrf.mxu0
    %v753 = vpop.f32.mrf.mxu0
    %754 = vdwg.mxu0
    %v755 = vld [vmem:[%s1] sm:$0xff]
    %v756 = vld [vmem:[%s1 + $0x8] sm:$0xff]
    %v757 = vld [vmem:[%s1 + $0x10] sm:$0xff]
    %v758 = vld [vmem:[%s1 + $0x18] sm:$0xff]
    %v759 = vld [vmem:[%s1 + $0x20] sm:$0xff]
    %v760 = vld [vmem:[%s1 + $0x28] sm:$0xff]
    %v761 = vld [vmem:[%s1 + $0x30] sm:$0xff]
    %v762 = vld [vmem:[%s1 + $0x38] sm:$0xff]
    %v763 = vadd.f32 %v755, %v407
    %v764 = vadd.f32 %v756, %v456
    %v765 = vadd.f32 %v757, %v505
    %v766 = vadd.f32 %v758, %v554
    %v767 = vadd.f32 %v759, %v603
    %v768 = vadd.f32 %v760, %v652
    %v769 = vadd.f32 %v761, %v701
    %v770 = vadd.f32 %v762, %v750
    %v771 = vlaneseq
    %v772 = vshrl.u32 %v771, 7
    %v773 = vlaneseq
    %v774 = vand.u32 %v773, 127
    %vm775 = vcmp.le.s32.totalorder %v774, %v772
    %v776 = vsel %vm775, 1, 0
    %vm777 = vcmp.eq.s32.totalorder %v776, 1
    %v778 = vsel %vm777, %v763, -inf
    %v779 = vsel %vm777, %v764, -inf
    %v780 = vsel %vm777, %v765, -inf
    %v781 = vsel %vm777, %v766, -inf
    %v782 = vsel %vm777, %v767, -inf
    %v783 = vsel %vm777, %v768, -inf
    %v784 = vsel %vm777, %v769, -inf
    %v785 = vsel %vm777, %v770, -inf
    %v786 = vsel %vm365, %v778, -inf
    %787 = vmax.xlane.f32.xlu0 %v786
    %v788 = vpop.xlane.xlu0 %787
    %v789 = vsel %vm365, %v779, -inf
    %790 = vmax.xlane.f32.xlu0 %v789
    %v791 = vpop.xlane.xlu0 %790
    %v792 = vsel %vm365, %v780, -inf
    %793 = vmax.xlane.f32.xlu0 %v792
    %v794 = vpop.xlane.xlu0 %793
    %v795 = vsel %vm365, %v781, -inf
    %796 = vmax.xlane.f32.xlu0 %v795
    %v797 = vpop.xlane.xlu0 %796
    %v798 = vsel %vm365, %v782, -inf
    %799 = vmax.xlane.f32.xlu0 %v798
    %v800 = vpop.xlane.xlu0 %799
    %v801 = vsel %vm365, %v783, -inf
    %802 = vmax.xlane.f32.xlu0 %v801
    %v803 = vpop.xlane.xlu0 %802
    %v804 = vsel %vm365, %v784, -inf
    %805 = vmax.xlane.f32.xlu0 %v804
    %v806 = vpop.xlane.xlu0 %805
    %v807 = vsel %vm365, %v785, -inf
    %808 = vmax.xlane.f32.xlu0 %v807
    %v809 = vpop.xlane.xlu0 %808
    %v810 = vsub.f32 %v778, %v788
    %v811 = vsub.f32 %v779, %v791
    %v812 = vsub.f32 %v780, %v794
    %v813 = vsub.f32 %v781, %v797
    %v814 = vsub.f32 %v782, %v800
    %v815 = vsub.f32 %v783, %v803
    %v816 = vsub.f32 %v784, %v806
    %v817 = vsub.f32 %v785, %v809
    %v818 = vmul.f32 %v810, 1.442695
    %v819 = vpow.pop %v818
    %v820 = vmul.f32 %v811, 1.442695
    %v821 = vpow.pop %v820
    %v822 = vmul.f32 %v812, 1.442695
    %v823 = vpow.pop %v822
    %v824 = vmul.f32 %v813, 1.442695
    %v825 = vpow.pop %v824
    %v826 = vmul.f32 %v814, 1.442695
    %v827 = vpow.pop %v826
    %v828 = vmul.f32 %v815, 1.442695
    %v829 = vpow.pop %v828
    %v830 = vmul.f32 %v816, 1.442695
    %v831 = vpow.pop %v830
    %v832 = vmul.f32 %v817, 1.442695
    %v833 = vpow.pop %v832
    %v834 = vsel %vm365, %v819, 0.0
    %835 = vadd.xlane.f32.xlu0 %v834
    %v836 = vpop.xlane.xlu0 %835
    %v837 = vsel %vm365, %v821, 0.0
    %838 = vadd.xlane.f32.xlu0 %v837
    %v839 = vpop.xlane.xlu0 %838
    %v840 = vsel %vm365, %v823, 0.0
    %841 = vadd.xlane.f32.xlu0 %v840
    %v842 = vpop.xlane.xlu0 %841
    %v843 = vsel %vm365, %v825, 0.0
    %844 = vadd.xlane.f32.xlu0 %v843
    %v845 = vpop.xlane.xlu0 %844
    %v846 = vsel %vm365, %v827, 0.0
    %847 = vadd.xlane.f32.xlu0 %v846
    %v848 = vpop.xlane.xlu0 %847
    %v849 = vsel %vm365, %v829, 0.0
    %850 = vadd.xlane.f32.xlu0 %v849
    %v851 = vpop.xlane.xlu0 %850
    %v852 = vsel %vm365, %v831, 0.0
    %853 = vadd.xlane.f32.xlu0 %v852
    %v854 = vpop.xlane.xlu0 %853
    %v855 = vsel %vm365, %v833, 0.0
    %856 = vadd.xlane.f32.xlu0 %v855
    %v857 = vpop.xlane.xlu0 %856
    %v858 = vrcp.pop %v836
    %v859 = vrcp.pop %v839
    %v860 = vrcp.pop %v842
    %v861 = vrcp.pop %v845
    %v862 = vrcp.pop %v848
    %v863 = vrcp.pop %v851
    %v864 = vrcp.pop %v854
    %v865 = vrcp.pop %v857
    %v866 = vmul.f32 %v819, %v858
    %v867 = vmul.f32 %v821, %v859
    %v868 = vmul.f32 %v823, %v860
    %v869 = vmul.f32 %v825, %v861
    %v870 = vmul.f32 %v827, %v862
    %v871 = vmul.f32 %v829, %v863
    %v872 = vmul.f32 %v831, %v864
    %v873 = vmul.f32 %v833, %v865
    %v874 = vpack.c.bf16 %v866, %v866
    %v875 = vpack.c.bf16 %v867, %v867
    %v876 = vpack.c.bf16 %v868, %v868
    %v877 = vpack.c.bf16 %v869, %v869
    %v878 = vpack.c.bf16 %v870, %v870
    %v879 = vpack.c.bf16 %v871, %v871
    %v880 = vpack.c.bf16 %v872, %v872
    %v881 = vpack.c.bf16 %v873, %v873
    %882 = vrot.lane.b32.xlu0 %v354, 64
    %v883 = vpop.permute.xlu0 %882
    %v885 = vsel %vm365, %v874, 0
    %vm887 = vcmask 1043456
    %v889 = vsel %vm887, %v883, 0
    %891 = vmatprep.subr.bf16.mxu0 0
    %892 = vmatpush1.bf16.msra.mxu0 0
    %893 = vmatprep.subr.bf16.mxu0 0
    %894 = vmatpush1.bf16.msra.mxu0 0
    %895 = vmatprep.subr.bf16.mxu0 0
    %896 = vmatpush1.bf16.msra.mxu0 0
    %897 = vmatprep.subr.bf16.mxu0 0
    %898 = vmatpush1.bf16.msra.mxu0 0
    %899 = vmatprep.subr.bf16.mxu0 0
    %900 = vmatpush1.bf16.msra.mxu0 0
    %901 = vmatprep.subr.bf16.mxu0 0
    %902 = vmatpush1.bf16.msra.mxu0 0
    %903 = vmatprep.subr.bf16.mxu0 0
    %904 = vmatpush1.bf16.msra.mxu0 0
    %905 = vmatprep.subr.bf16.mxu0 0
    %906 = vmatpush1.bf16.msra.mxu0 %v889
    %907 = vmatprep.subr.bf16.mxu0 0
    %908 = vmatpush2.bf16.msra.mxu0 0
    %909 = vmatprep.subr.bf16.mxu0 0
    %910 = vmatpush2.bf16.msra.mxu0 0
    %911 = vmatprep.subr.bf16.mxu0 0
    %912 = vmatpush2.bf16.msra.mxu0 0
    %913 = vmatprep.subr.bf16.mxu0 0
    %914 = vmatpush2.bf16.msra.mxu0 0
    %915 = vmatprep.subr.bf16.mxu0 0
    %916 = vmatpush2.bf16.msra.mxu0 0
    %917 = vmatprep.subr.bf16.mxu0 0
    %918 = vmatpush2.bf16.msra.mxu0 0
    %919 = vmatprep.subr.bf16.mxu0 0
    %920 = vmatpush2.bf16.msra.mxu0 0
    %921 = vmatprep.subr.bf16.mxu0 0
    %922 = vmatpush2.bf16.msra.mxu0 0
    %923 = vmatprep.mubr.bf16.mxu0 0
    %924 = vmatmul.mubr.bf16.gmra.mxu0 %v885
    %v925 = vpop.f32.mrf.mxu0
    %v926 = vadd.f32 0.0, %v925
    %v927 = vpop.f32.mrf.mxu0
    %v928 = vpop.f32.mrf.mxu0
    %v929 = vpop.f32.mrf.mxu0
    %930 = vdwg.mxu0
    %931 = vrot.lane.b32.xlu0 %v355, 64
    %v932 = vpop.permute.xlu0 %931
    %v934 = vsel %vm365, %v875, 0
    %v937 = vsel %vm887, %v932, 0
    %939 = vmatprep.subr.bf16.mxu0 0
    %940 = vmatpush1.bf16.msra.mxu0 0
    %941 = vmatprep.subr.bf16.mxu0 0
    %942 = vmatpush1.bf16.msra.mxu0 0
    %943 = vmatprep.subr.bf16.mxu0 0
    %944 = vmatpush1.bf16.msra.mxu0 0
    %945 = vmatprep.subr.bf16.mxu0 0
    %946 = vmatpush1.bf16.msra.mxu0 0
    %947 = vmatprep.subr.bf16.mxu0 0
    %948 = vmatpush1.bf16.msra.mxu0 0
    %949 = vmatprep.subr.bf16.mxu0 0
    %950 = vmatpush1.bf16.msra.mxu0 0
    %951 = vmatprep.subr.bf16.mxu0 0
    %952 = vmatpush1.bf16.msra.mxu0 0
    %953 = vmatprep.subr.bf16.mxu0 0
    %954 = vmatpush1.bf16.msra.mxu0 %v937
    %955 = vmatprep.subr.bf16.mxu0 0
    %956 = vmatpush2.bf16.msra.mxu0 0
    %957 = vmatprep.subr.bf16.mxu0 0
    %958 = vmatpush2.bf16.msra.mxu0 0
    %959 = vmatprep.subr.bf16.mxu0 0
    %960 = vmatpush2.bf16.msra.mxu0 0
    %961 = vmatprep.subr.bf16.mxu0 0
    %962 = vmatpush2.bf16.msra.mxu0 0
    %963 = vmatprep.subr.bf16.mxu0 0
    %964 = vmatpush2.bf16.msra.mxu0 0
    %965 = vmatprep.subr.bf16.mxu0 0
    %966 = vmatpush2.bf16.msra.mxu0 0
    %967 = vmatprep.subr.bf16.mxu0 0
    %968 = vmatpush2.bf16.msra.mxu0 0
    %969 = vmatprep.subr.bf16.mxu0 0
    %970 = vmatpush2.bf16.msra.mxu0 0
    %971 = vmatprep.mubr.bf16.mxu0 0
    %972 = vmatmul.mubr.bf16.gmra.mxu0 %v934
    %v973 = vpop.f32.mrf.mxu0
    %v974 = vadd.f32 0.0, %v973
    %v975 = vpop.f32.mrf.mxu0
    %v976 = vpop.f32.mrf.mxu0
    %v977 = vpop.f32.mrf.mxu0
    %978 = vdwg.mxu0
    %979 = vrot.lane.b32.xlu0 %v356, 64
    %v980 = vpop.permute.xlu0 %979
    %v982 = vsel %vm365, %v876, 0
    %v985 = vsel %vm887, %v980, 0
    %987 = vmatprep.subr.bf16.mxu0 0
    %988 = vmatpush1.bf16.msra.mxu0 0
    %989 = vmatprep.subr.bf16.mxu0 0
    %990 = vmatpush1.bf16.msra.mxu0 0
    %991 = vmatprep.subr.bf16.mxu0 0
    %992 = vmatpush1.bf16.msra.mxu0 0
    %993 = vmatprep.subr.bf16.mxu0 0
    %994 = vmatpush1.bf16.msra.mxu0 0
    %995 = vmatprep.subr.bf16.mxu0 0
    %996 = vmatpush1.bf16.msra.mxu0 0
    %997 = vmatprep.subr.bf16.mxu0 0
    %998 = vmatpush1.bf16.msra.mxu0 0
    %999 = vmatprep.subr.bf16.mxu0 0
    %1000 = vmatpush1.bf16.msra.mxu0 0
    %1001 = vmatprep.subr.bf16.mxu0 0
    %1002 = vmatpush1.bf16.msra.mxu0 %v985
    %1003 = vmatprep.subr.bf16.mxu0 0
    %1004 = vmatpush2.bf16.msra.mxu0 0
    %1005 = vmatprep.subr.bf16.mxu0 0
    %1006 = vmatpush2.bf16.msra.mxu0 0
    %1007 = vmatprep.subr.bf16.mxu0 0
    %1008 = vmatpush2.bf16.msra.mxu0 0
    %1009 = vmatprep.subr.bf16.mxu0 0
    %1010 = vmatpush2.bf16.msra.mxu0 0
    %1011 = vmatprep.subr.bf16.mxu0 0
    %1012 = vmatpush2.bf16.msra.mxu0 0
    %1013 = vmatprep.subr.bf16.mxu0 0
    %1014 = vmatpush2.bf16.msra.mxu0 0
    %1015 = vmatprep.subr.bf16.mxu0 0
    %1016 = vmatpush2.bf16.msra.mxu0 0
    %1017 = vmatprep.subr.bf16.mxu0 0
    %1018 = vmatpush2.bf16.msra.mxu0 0
    %1019 = vmatprep.mubr.bf16.mxu0 0
    %1020 = vmatmul.mubr.bf16.gmra.mxu0 %v982
    %v1021 = vpop.f32.mrf.mxu0
    %v1022 = vadd.f32 0.0, %v1021
    %v1023 = vpop.f32.mrf.mxu0
    %v1024 = vpop.f32.mrf.mxu0
    %v1025 = vpop.f32.mrf.mxu0
    %1026 = vdwg.mxu0
    %1027 = vrot.lane.b32.xlu0 %v357, 64
    %v1028 = vpop.permute.xlu0 %1027
    %v1030 = vsel %vm365, %v877, 0
    %v1033 = vsel %vm887, %v1028, 0
    %1035 = vmatprep.subr.bf16.mxu0 0
    %1036 = vmatpush1.bf16.msra.mxu0 0
    %1037 = vmatprep.subr.bf16.mxu0 0
    %1038 = vmatpush1.bf16.msra.mxu0 0
    %1039 = vmatprep.subr.bf16.mxu0 0
    %1040 = vmatpush1.bf16.msra.mxu0 0
    %1041 = vmatprep.subr.bf16.mxu0 0
    %1042 = vmatpush1.bf16.msra.mxu0 0
    %1043 = vmatprep.subr.bf16.mxu0 0
    %1044 = vmatpush1.bf16.msra.mxu0 0
    %1045 = vmatprep.subr.bf16.mxu0 0
    %1046 = vmatpush1.bf16.msra.mxu0 0
    %1047 = vmatprep.subr.bf16.mxu0 0
    %1048 = vmatpush1.bf16.msra.mxu0 0
    %1049 = vmatprep.subr.bf16.mxu0 0
    %1050 = vmatpush1.bf16.msra.mxu0 %v1033
    %1051 = vmatprep.subr.bf16.mxu0 0
    %1052 = vmatpush2.bf16.msra.mxu0 0
    %1053 = vmatprep.subr.bf16.mxu0 0
    %1054 = vmatpush2.bf16.msra.mxu0 0
    %1055 = vmatprep.subr.bf16.mxu0 0
    %1056 = vmatpush2.bf16.msra.mxu0 0
    %1057 = vmatprep.subr.bf16.mxu0 0
    %1058 = vmatpush2.bf16.msra.mxu0 0
    %1059 = vmatprep.subr.bf16.mxu0 0
    %1060 = vmatpush2.bf16.msra.mxu0 0
    %1061 = vmatprep.subr.bf16.mxu0 0
    %1062 = vmatpush2.bf16.msra.mxu0 0
    %1063 = vmatprep.subr.bf16.mxu0 0
    %1064 = vmatpush2.bf16.msra.mxu0 0
    %1065 = vmatprep.subr.bf16.mxu0 0
    %1066 = vmatpush2.bf16.msra.mxu0 0
    %1067 = vmatprep.mubr.bf16.mxu0 0
    %1068 = vmatmul.mubr.bf16.gmra.mxu0 %v1030
    %v1069 = vpop.f32.mrf.mxu0
    %v1070 = vadd.f32 0.0, %v1069
    %v1071 = vpop.f32.mrf.mxu0
    %v1072 = vpop.f32.mrf.mxu0
    %v1073 = vpop.f32.mrf.mxu0
    %1074 = vdwg.mxu0
    %1075 = vrot.lane.b32.xlu0 %v358, 64
    %v1076 = vpop.permute.xlu0 %1075
    %v1078 = vsel %vm365, %v878, 0
    %v1081 = vsel %vm887, %v1076, 0
    %1083 = vmatprep.subr.bf16.mxu0 0
    %1084 = vmatpush1.bf16.msra.mxu0 0
    %1085 = vmatprep.subr.bf16.mxu0 0
    %1086 = vmatpush1.bf16.msra.mxu0 0
    %1087 = vmatprep.subr.bf16.mxu0 0
    %1088 = vmatpush1.bf16.msra.mxu0 0
    %1089 = vmatprep.subr.bf16.mxu0 0
    %1090 = vmatpush1.bf16.msra.mxu0 0
    %1091 = vmatprep.subr.bf16.mxu0 0
    %1092 = vmatpush1.bf16.msra.mxu0 0
    %1093 = vmatprep.subr.bf16.mxu0 0
    %1094 = vmatpush1.bf16.msra.mxu0 0
    %1095 = vmatprep.subr.bf16.mxu0 0
    %1096 = vmatpush1.bf16.msra.mxu0 0
    %1097 = vmatprep.subr.bf16.mxu0 0
    %1098 = vmatpush1.bf16.msra.mxu0 %v1081
    %1099 = vmatprep.subr.bf16.mxu0 0
    %1100 = vmatpush2.bf16.msra.mxu0 0
    %1101 = vmatprep.subr.bf16.mxu0 0
    %1102 = vmatpush2.bf16.msra.mxu0 0
    %1103 = vmatprep.subr.bf16.mxu0 0
    %1104 = vmatpush2.bf16.msra.mxu0 0
    %1105 = vmatprep.subr.bf16.mxu0 0
    %1106 = vmatpush2.bf16.msra.mxu0 0
    %1107 = vmatprep.subr.bf16.mxu0 0
    %1108 = vmatpush2.bf16.msra.mxu0 0
    %1109 = vmatprep.subr.bf16.mxu0 0
    %1110 = vmatpush2.bf16.msra.mxu0 0
    %1111 = vmatprep.subr.bf16.mxu0 0
    %1112 = vmatpush2.bf16.msra.mxu0 0
    %1113 = vmatprep.subr.bf16.mxu0 0
    %1114 = vmatpush2.bf16.msra.mxu0 0
    %1115 = vmatprep.mubr.bf16.mxu0 0
    %1116 = vmatmul.mubr.bf16.gmra.mxu0 %v1078
    %v1117 = vpop.f32.mrf.mxu0
    %v1118 = vadd.f32 0.0, %v1117
    %v1119 = vpop.f32.mrf.mxu0
    %v1120 = vpop.f32.mrf.mxu0
    %v1121 = vpop.f32.mrf.mxu0
    %1122 = vdwg.mxu0
    %1123 = vrot.lane.b32.xlu0 %v359, 64
    %v1124 = vpop.permute.xlu0 %1123
    %v1126 = vsel %vm365, %v879, 0
    %v1129 = vsel %vm887, %v1124, 0
    %1131 = vmatprep.subr.bf16.mxu0 0
    %1132 = vmatpush1.bf16.msra.mxu0 0
    %1133 = vmatprep.subr.bf16.mxu0 0
    %1134 = vmatpush1.bf16.msra.mxu0 0
    %1135 = vmatprep.subr.bf16.mxu0 0
    %1136 = vmatpush1.bf16.msra.mxu0 0
    %1137 = vmatprep.subr.bf16.mxu0 0
    %1138 = vmatpush1.bf16.msra.mxu0 0
    %1139 = vmatprep.subr.bf16.mxu0 0
    %1140 = vmatpush1.bf16.msra.mxu0 0
    %1141 = vmatprep.subr.bf16.mxu0 0
    %1142 = vmatpush1.bf16.msra.mxu0 0
    %1143 = vmatprep.subr.bf16.mxu0 0
    %1144 = vmatpush1.bf16.msra.mxu0 0
    %1145 = vmatprep.subr.bf16.mxu0 0
    %1146 = vmatpush1.bf16.msra.mxu0 %v1129
    %1147 = vmatprep.subr.bf16.mxu0 0
    %1148 = vmatpush2.bf16.msra.mxu0 0
    %1149 = vmatprep.subr.bf16.mxu0 0
    %1150 = vmatpush2.bf16.msra.mxu0 0
    %1151 = vmatprep.subr.bf16.mxu0 0
    %1152 = vmatpush2.bf16.msra.mxu0 0
    %1153 = vmatprep.subr.bf16.mxu0 0
    %1154 = vmatpush2.bf16.msra.mxu0 0
    %1155 = vmatprep.subr.bf16.mxu0 0
    %1156 = vmatpush2.bf16.msra.mxu0 0
    %1157 = vmatprep.subr.bf16.mxu0 0
    %1158 = vmatpush2.bf16.msra.mxu0 0
    %1159 = vmatprep.subr.bf16.mxu0 0
    %1160 = vmatpush2.bf16.msra.mxu0 0
    %1161 = vmatprep.subr.bf16.mxu0 0
    %1162 = vmatpush2.bf16.msra.mxu0 0
    %1163 = vmatprep.mubr.bf16.mxu0 0
    %1164 = vmatmul.mubr.bf16.gmra.mxu0 %v1126
    %v1165 = vpop.f32.mrf.mxu0
    %v1166 = vadd.f32 0.0, %v1165
    %v1167 = vpop.f32.mrf.mxu0
    %v1168 = vpop.f32.mrf.mxu0
    %v1169 = vpop.f32.mrf.mxu0
    %1170 = vdwg.mxu0
    %1171 = vrot.lane.b32.xlu0 %v360, 64
    %v1172 = vpop.permute.xlu0 %1171
    %v1174 = vsel %vm365, %v880, 0
    %v1177 = vsel %vm887, %v1172, 0
    %1179 = vmatprep.subr.bf16.mxu0 0
    %1180 = vmatpush1.bf16.msra.mxu0 0
    %1181 = vmatprep.subr.bf16.mxu0 0
    %1182 = vmatpush1.bf16.msra.mxu0 0
    %1183 = vmatprep.subr.bf16.mxu0 0
    %1184 = vmatpush1.bf16.msra.mxu0 0
    %1185 = vmatprep.subr.bf16.mxu0 0
    %1186 = vmatpush1.bf16.msra.mxu0 0
    %1187 = vmatprep.subr.bf16.mxu0 0
    %1188 = vmatpush1.bf16.msra.mxu0 0
    %1189 = vmatprep.subr.bf16.mxu0 0
    %1190 = vmatpush1.bf16.msra.mxu0 0
    %1191 = vmatprep.subr.bf16.mxu0 0
    %1192 = vmatpush1.bf16.msra.mxu0 0
    %1193 = vmatprep.subr.bf16.mxu0 0
    %1194 = vmatpush1.bf16.msra.mxu0 %v1177
    %1195 = vmatprep.subr.bf16.mxu0 0
    %1196 = vmatpush2.bf16.msra.mxu0 0
    %1197 = vmatprep.subr.bf16.mxu0 0
    %1198 = vmatpush2.bf16.msra.mxu0 0
    %1199 = vmatprep.subr.bf16.mxu0 0
    %1200 = vmatpush2.bf16.msra.mxu0 0
    %1201 = vmatprep.subr.bf16.mxu0 0
    %1202 = vmatpush2.bf16.msra.mxu0 0
    %1203 = vmatprep.subr.bf16.mxu0 0
    %1204 = vmatpush2.bf16.msra.mxu0 0
    %1205 = vmatprep.subr.bf16.mxu0 0
    %1206 = vmatpush2.bf16.msra.mxu0 0
    %1207 = vmatprep.subr.bf16.mxu0 0
    %1208 = vmatpush2.bf16.msra.mxu0 0
    %1209 = vmatprep.subr.bf16.mxu0 0
    %1210 = vmatpush2.bf16.msra.mxu0 0
    %1211 = vmatprep.mubr.bf16.mxu0 0
    %1212 = vmatmul.mubr.bf16.gmra.mxu0 %v1174
    %v1213 = vpop.f32.mrf.mxu0
    %v1214 = vadd.f32 0.0, %v1213
    %v1215 = vpop.f32.mrf.mxu0
    %v1216 = vpop.f32.mrf.mxu0
    %v1217 = vpop.f32.mrf.mxu0
    %1218 = vdwg.mxu0
    %1219 = vrot.lane.b32.xlu0 %v361, 64
    %v1220 = vpop.permute.xlu0 %1219
    %v1222 = vsel %vm365, %v881, 0
    %v1225 = vsel %vm887, %v1220, 0
    %1227 = vmatprep.subr.bf16.mxu0 0
    %1228 = vmatpush1.bf16.msra.mxu0 0
    %1229 = vmatprep.subr.bf16.mxu0 0
    %1230 = vmatpush1.bf16.msra.mxu0 0
    %1231 = vmatprep.subr.bf16.mxu0 0
    %1232 = vmatpush1.bf16.msra.mxu0 0
    %1233 = vmatprep.subr.bf16.mxu0 0
    %1234 = vmatpush1.bf16.msra.mxu0 0
    %1235 = vmatprep.subr.bf16.mxu0 0
    %1236 = vmatpush1.bf16.msra.mxu0 0
    %1237 = vmatprep.subr.bf16.mxu0 0
    %1238 = vmatpush1.bf16.msra.mxu0 0
    %1239 = vmatprep.subr.bf16.mxu0 0
    %1240 = vmatpush1.bf16.msra.mxu0 0
    %1241 = vmatprep.subr.bf16.mxu0 0
    %1242 = vmatpush1.bf16.msra.mxu0 %v1225
    %1243 = vmatprep.subr.bf16.mxu0 0
    %1244 = vmatpush2.bf16.msra.mxu0 0
    %1245 = vmatprep.subr.bf16.mxu0 0
    %1246 = vmatpush2.bf16.msra.mxu0 0
    %1247 = vmatprep.subr.bf16.mxu0 0
    %1248 = vmatpush2.bf16.msra.mxu0 0
    %1249 = vmatprep.subr.bf16.mxu0 0
    %1250 = vmatpush2.bf16.msra.mxu0 0
    %1251 = vmatprep.subr.bf16.mxu0 0
    %1252 = vmatpush2.bf16.msra.mxu0 0
    %1253 = vmatprep.subr.bf16.mxu0 0
    %1254 = vmatpush2.bf16.msra.mxu0 0
    %1255 = vmatprep.subr.bf16.mxu0 0
    %1256 = vmatpush2.bf16.msra.mxu0 0
    %1257 = vmatprep.subr.bf16.mxu0 0
    %1258 = vmatpush2.bf16.msra.mxu0 0
    %1259 = vmatprep.mubr.bf16.mxu0 0
    %1260 = vmatmul.mubr.bf16.gmra.mxu0 %v1222
    %v1261 = vpop.f32.mrf.mxu0
    %v1262 = vadd.f32 0.0, %v1261
    %v1263 = vpop.f32.mrf.mxu0
    %v1264 = vpop.f32.mrf.mxu0
    %v1265 = vpop.f32.mrf.mxu0
    %1266 = vdwg.mxu0
    %1268 = vrot.lane.b32.xlu0 %v974, 8
    %v1269 = vpop.permute.xlu0 %1268
    %1272 = vrot.lane.b32.xlu0 %v1022, 16
    %v1273 = vpop.permute.xlu0 %1272
    %1276 = vrot.lane.b32.xlu0 %v1070, 24
    %v1277 = vpop.permute.xlu0 %1276
    %v1279 = vsel %vm365, %v926, %v1269
    %vm1280 = vcmask 130048
    %v1281 = vsel %vm1280, %v1279, %v1273
    %vm1282 = vcmask 195584
    %v1283 = vsel %vm1282, %v1281, %v1277
    %1285 = vrot.lane.b32.xlu0 %v1166, 8
    %v1286 = vpop.permute.xlu0 %1285
    %1289 = vrot.lane.b32.xlu0 %v1214, 16
    %v1290 = vpop.permute.xlu0 %1289
    %1293 = vrot.lane.b32.xlu0 %v1262, 24
    %v1294 = vpop.permute.xlu0 %1293
    %v1296 = vsel %vm365, %v1118, %v1286
    %v1297 = vsel %vm1280, %v1296, %v1290
    %v1298 = vsel %vm1282, %v1297, %v1294
    %v1299 = vpack.c.bf16 %v1298, %v1283
    %v1300 = vld [vmem:[#allocation13] sm:$0xf]
    %v1301 = vld [vmem:[#allocation13 + $0x4] sm:$0xf]
    %v1302 = vld [vmem:[#allocation13 + $0x8] sm:$0xf]
    %v1303 = vld [vmem:[#allocation13 + $0xc] sm:$0xf]
    %v1304 = vld [vmem:[#allocation14] sm:$0x1]
    %v1306 = vlaneseq
    %v1307 = vshrl.u32 %v1306, 7
    %v1308 = vsub.s32 0, %v1307
    %v1309 = vrot.slane %v1304, %v1308
    %v1315 = vunpack.c.l.b16 %v1300
    %v1316 = vunpack.c.l.b16 %v1301
    %v1317 = vunpack.c.l.b16 %v1302
    %v1318 = vunpack.c.l.b16 %v1303
    %v1319 = vpack.c.b16 %v1316, %v1315
    %v1320 = vpack.c.b16 %v1318, %v1317
    %v1324 = vsel %vm152, %v1299, 0
    %1326 = vmatprep.subr.bf16.mxu0 0
    %1327 = vmatpush1.bf16.msra.mxu0 0
    %1328 = vmatprep.subr.bf16.mxu0 0
    %1329 = vmatpush1.bf16.msra.mxu0 0
    %1330 = vmatprep.subr.bf16.mxu0 0
    %1331 = vmatpush1.bf16.msra.mxu0 0
    %1332 = vmatprep.subr.bf16.mxu0 0
    %1333 = vmatpush1.bf16.msra.mxu0 0
    %1334 = vmatprep.subr.bf16.mxu0 0
    %1335 = vmatpush1.bf16.msra.mxu0 0
    %1336 = vmatprep.subr.bf16.mxu0 0
    %1337 = vmatpush1.bf16.msra.mxu0 0
    %1338 = vmatprep.subr.bf16.mxu0 0
    %1339 = vmatpush1.bf16.msra.mxu0 %v1320
    %1340 = vmatprep.subr.bf16.mxu0 0
    %1341 = vmatpush1.bf16.msra.mxu0 %v1319
    %1342 = vmatprep.subr.bf16.mxu0 0
    %1343 = vmatpush2.bf16.msra.mxu0 0
    %1344 = vmatprep.subr.bf16.mxu0 0
    %1345 = vmatpush2.bf16.msra.mxu0 0
    %1346 = vmatprep.subr.bf16.mxu0 0
    %1347 = vmatpush2.bf16.msra.mxu0 0
    %1348 = vmatprep.subr.bf16.mxu0 0
    %1349 = vmatpush2.bf16.msra.mxu0 0
    %1350 = vmatprep.subr.bf16.mxu0 0
    %1351 = vmatpush2.bf16.msra.mxu0 0
    %1352 = vmatprep.subr.bf16.mxu0 0
    %1353 = vmatpush2.bf16.msra.mxu0 0
    %1354 = vmatprep.subr.bf16.mxu0 0
    %1355 = vmatpush2.bf16.msra.mxu0 0
    %1356 = vmatprep.subr.bf16.mxu0 0
    %1357 = vmatpush2.bf16.msra.mxu0 0
    %1358 = vmatprep.mubr.bf16.mxu0 0
    %1359 = vmatmul.mubr.bf16.gmra.mxu0 %v1324
    %v1360 = vpop.f32.mrf.mxu0
    %v1361 = vadd.f32 %v1309, %v1360
    %v1362 = vpop.f32.mrf.mxu0
    %v1363 = vpop.f32.mrf.mxu0
    %v1364 = vadd.f32 %v1309, %v1363
    %v1365 = vpop.f32.mrf.mxu0
    %1366 = vdwg.mxu0
    %v1367 = vadd.f32 %v146, %v1361
    %v1368 = vadd.f32 %v147, %v1364
    %v1369 = vld [vmem:[#allocation8] sm:$0x1]
    %v1370 = vld [vmem:[#allocation10] sm:$0x1]
    %v1371 = vsel %vm152, %v1367, 0.0
    %1372 = vadd.xlane.f32.xlu0 %v1371
    %v1373 = vpop.xlane.xlu0 %1372
    %v1374 = vsel %vm152, %v1368, 0.0
    %1375 = vadd.xlane.f32.xlu0 %v1374
    %v1376 = vpop.xlane.xlu0 %1375
    %v1377 = vmul.f32 %v1373, %v165
    %v1378 = vmul.f32 %v1376, %v165
    %v1379 = vsub.f32 %v1367, %v1377
    %v1380 = vsub.f32 %v1368, %v1378
    %v1381 = vmul.f32 %v1379, %v1379
    %v1382 = vmul.f32 %v1380, %v1380
    %v1383 = vsel %vm152, %v1381, 0.0
    %1384 = vadd.xlane.f32.xlu0 %v1383
    %v1385 = vpop.xlane.xlu0 %1384
    %v1386 = vsel %vm152, %v1382, 0.0
    %1387 = vadd.xlane.f32.xlu0 %v1386
    %v1388 = vpop.xlane.xlu0 %1387
    %v1389 = vmul.f32 %v1385, %v165
    %v1390 = vmul.f32 %v1388, %v165
    %v1391 = vadd.f32 %v1389, 1e-05
    %v1392 = vadd.f32 %v1390, 1e-05
    %v1393 = vrsqrt.pop %v1391
    %v1394 = vrsqrt.pop %v1392
    %v1395 = vmul.f32 %v1379, %v1393
    %v1396 = vmul.f32 %v1380, %v1394
    %v1398 = vlaneseq
    %v1399 = vshrl.u32 %v1398, 7
    %v1400 = vsub.s32 0, %v1399
    %v1401 = vrot.slane %v1369, %v1400
    %v1403 = vmul.f32 %v1395, %v1401
    %v1404 = vmul.f32 %v1396, %v1401
    %v1406 = vlaneseq
    %v1407 = vshrl.u32 %v1406, 7
    %v1408 = vsub.s32 0, %v1407
    %v1409 = vrot.slane %v1370, %v1408
    %v1411 = vadd.f32 %v1403, %v1409
    %v1412 = vadd.f32 %v1404, %v1409
    %v1413 = vpack.c.bf16 %v1412, %v1411
    %v1414 = vld [vmem:[%s10] sm:$0xf]
    %v1415 = vld [vmem:[%s10 + $0x4] sm:$0xf]
    %v1416 = vld [vmem:[%s10 + $0x8] sm:$0xf]
    %v1417 = vld [vmem:[%s10 + $0xc] sm:$0xf]
    %v1418 = vld [vmem:[%s11] sm:$0x1]
    %v1420 = vlaneseq
    %v1421 = vshrl.u32 %v1420, 7
    %v1422 = vsub.s32 0, %v1421
    %v1423 = vrot.slane %v1418, %v1422
    %v1429 = vunpack.c.l.b16 %v1414
    %v1430 = vunpack.c.l.b16 %v1415
    %v1431 = vunpack.c.l.b16 %v1416
    %v1432 = vunpack.c.l.b16 %v1417
    %v1433 = vpack.c.b16 %v1430, %v1429
    %v1434 = vpack.c.b16 %v1432, %v1431
    %v1438 = vsel %vm152, %v1413, 0
    %1440 = vmatprep.subr.bf16.mxu0 0
    %1441 = vmatpush1.bf16.msra.mxu0 0
    %1442 = vmatprep.subr.bf16.mxu0 0
    %1443 = vmatpush1.bf16.msra.mxu0 0
    %1444 = vmatprep.subr.bf16.mxu0 0
    %1445 = vmatpush1.bf16.msra.mxu0 0
    %1446 = vmatprep.subr.bf16.mxu0 0
    %1447 = vmatpush1.bf16.msra.mxu0 0
    %1448 = vmatprep.subr.bf16.mxu0 0
    %1449 = vmatpush1.bf16.msra.mxu0 0
    %1450 = vmatprep.subr.bf16.mxu0 0
    %1451 = vmatpush1.bf16.msra.mxu0 0
    %1452 = vmatprep.subr.bf16.mxu0 0
    %1453 = vmatpush1.bf16.msra.mxu0 %v1434
    %1454 = vmatprep.subr.bf16.mxu0 0
    %1455 = vmatpush1.bf16.msra.mxu0 %v1433
    %1456 = vmatprep.subr.bf16.mxu0 0
    %1457 = vmatpush2.bf16.msra.mxu0 0
    %1458 = vmatprep.subr.bf16.mxu0 0
    %1459 = vmatpush2.bf16.msra.mxu0 0
    %1460 = vmatprep.subr.bf16.mxu0 0
    %1461 = vmatpush2.bf16.msra.mxu0 0
    %1462 = vmatprep.subr.bf16.mxu0 0
    %1463 = vmatpush2.bf16.msra.mxu0 0
    %1464 = vmatprep.subr.bf16.mxu0 0
    %1465 = vmatpush2.bf16.msra.mxu0 0
    %1466 = vmatprep.subr.bf16.mxu0 0
    %1467 = vmatpush2.bf16.msra.mxu0 0
    %1468 = vmatprep.subr.bf16.mxu0 0
    %1469 = vmatpush2.bf16.msra.mxu0 0
    %1470 = vmatprep.subr.bf16.mxu0 0
    %1471 = vmatpush2.bf16.msra.mxu0 0
    %1472 = vmatprep.mubr.bf16.mxu0 0
    %1473 = vmatmul.mubr.bf16.gmra.mxu0 %v1438
    %v1474 = vpop.f32.mrf.mxu0
    %v1475 = vadd.f32 %v1423, %v1474
    %v1476 = vpop.f32.mrf.mxu0
    %v1477 = vpop.f32.mrf.mxu0
    %v1478 = vadd.f32 %v1423, %v1477
    %v1479 = vpop.f32.mrf.mxu0
    %1480 = vdwg.mxu0
    %v1481 = vmul.f32 %v1475, 0.5
    %v1482 = vmul.f32 %v1478, 0.5
    %v1483 = vmul.f32 %v1475, 0.70710677
    %v1484 = vmul.f32 %v1478, 0.70710677
    %v1485 = verf.f32.pop %v1483
    %v1486 = verf.f32.pop %v1484
    %v1487 = vadd.f32 %v1485, 1.0
    %v1488 = vadd.f32 %v1486, 1.0
    %v1489 = vmul.f32 %v1481, %v1487
    %v1490 = vmul.f32 %v1482, %v1488
    %v1491 = vpack.c.bf16 %v1490, %v1489
    %v1492 = vld [vmem:[%s12] sm:$0xf]
    %v1493 = vld [vmem:[%s12 + $0x4] sm:$0xf]
    %v1494 = vld [vmem:[%s12 + $0x8] sm:$0xf]
    %v1495 = vld [vmem:[%s12 + $0xc] sm:$0xf]
    %v1496 = vld [vmem:[%s12 + $0x10] sm:$0xf]
    %v1497 = vld [vmem:[%s12 + $0x14] sm:$0xf]
    %v1498 = vld [vmem:[%s12 + $0x18] sm:$0xf]
    %v1499 = vld [vmem:[%s12 + $0x1c] sm:$0xf]
    %v1500 = vld [vmem:[%s12 + $0x20] sm:$0xf]
    %v1501 = vld [vmem:[%s12 + $0x24] sm:$0xf]
    %v1502 = vld [vmem:[%s12 + $0x28] sm:$0xf]
    %v1503 = vld [vmem:[%s12 + $0x2c] sm:$0xf]
    %v1504 = vld [vmem:[%s12 + $0x30] sm:$0xf]
    %v1505 = vld [vmem:[%s12 + $0x34] sm:$0xf]
    %v1506 = vld [vmem:[%s12 + $0x38] sm:$0xf]
    %v1507 = vld [vmem:[%s12 + $0x3c] sm:$0xf]
    %v1508 = vld [vmem:[%s13] sm:$0x1]
    %v1510 = vlaneseq
    %v1511 = vshrl.u32 %v1510, 7
    %v1512 = vsub.s32 0, %v1511
    %v1513 = vrot.slane %v1508, %v1512
    %v1531 = vunpack.c.l.b16 %v1492
    %v1532 = vunpack.c.l.b16 %v1493
    %v1533 = vunpack.c.l.b16 %v1494
    %v1534 = vunpack.c.l.b16 %v1495
    %v1535 = vunpack.c.l.b16 %v1496
    %v1536 = vunpack.c.l.b16 %v1497
    %v1537 = vunpack.c.l.b16 %v1498
    %v1538 = vunpack.c.l.b16 %v1499
    %v1539 = vunpack.c.l.b16 %v1500
    %v1540 = vunpack.c.l.b16 %v1501
    %v1541 = vunpack.c.l.b16 %v1502
    %v1542 = vunpack.c.l.b16 %v1503
    %v1543 = vunpack.c.l.b16 %v1504
    %v1544 = vunpack.c.l.b16 %v1505
    %v1545 = vunpack.c.l.b16 %v1506
    %v1546 = vunpack.c.l.b16 %v1507
    %v1547 = vpack.c.b16 %v1532, %v1531
    %v1548 = vpack.c.b16 %v1534, %v1533
    %v1549 = vpack.c.b16 %v1536, %v1535
    %v1550 = vpack.c.b16 %v1538, %v1537
    %v1551 = vpack.c.b16 %v1540, %v1539
    %v1552 = vpack.c.b16 %v1542, %v1541
    %v1553 = vpack.c.b16 %v1544, %v1543
    %v1554 = vpack.c.b16 %v1546, %v1545
    %1563 = vmatprep.subr.bf16.mxu0 0
    %1564 = vmatpush1.bf16.msra.mxu0 %v1554
    %1565 = vmatprep.subr.bf16.mxu0 0
    %1566 = vmatpush1.bf16.msra.mxu0 %v1553
    %1567 = vmatprep.subr.bf16.mxu0 0
    %1568 = vmatpush1.bf16.msra.mxu0 %v1552
    %1569 = vmatprep.subr.bf16.mxu0 0
    %1570 = vmatpush1.bf16.msra.mxu0 %v1551
    %1571 = vmatprep.subr.bf16.mxu0 0
    %1572 = vmatpush1.bf16.msra.mxu0 %v1550
    %1573 = vmatprep.subr.bf16.mxu0 0
    %1574 = vmatpush1.bf16.msra.mxu0 %v1549
    %1575 = vmatprep.subr.bf16.mxu0 0
    %1576 = vmatpush1.bf16.msra.mxu0 %v1548
    %1577 = vmatprep.subr.bf16.mxu0 0
    %1578 = vmatpush1.bf16.msra.mxu0 %v1547
    %1579 = vmatprep.subr.bf16.mxu0 0
    %1580 = vmatpush2.bf16.msra.mxu0 0
    %1581 = vmatprep.subr.bf16.mxu0 0
    %1582 = vmatpush2.bf16.msra.mxu0 0
    %1583 = vmatprep.subr.bf16.mxu0 0
    %1584 = vmatpush2.bf16.msra.mxu0 0
    %1585 = vmatprep.subr.bf16.mxu0 0
    %1586 = vmatpush2.bf16.msra.mxu0 0
    %1587 = vmatprep.subr.bf16.mxu0 0
    %1588 = vmatpush2.bf16.msra.mxu0 0
    %1589 = vmatprep.subr.bf16.mxu0 0
    %1590 = vmatpush2.bf16.msra.mxu0 0
    %1591 = vmatprep.subr.bf16.mxu0 0
    %1592 = vmatpush2.bf16.msra.mxu0 0
    %1593 = vmatprep.subr.bf16.mxu0 0
    %1594 = vmatpush2.bf16.msra.mxu0 0
    %1595 = vmatprep.mubr.bf16.mxu0 0
    %1596 = vmatmul.mubr.bf16.gmra.mxu0 %v1491
    %v1597 = vpop.f32.mrf.mxu0
    %v1598 = vadd.f32 %v1513, %v1597
    %v1599 = vpop.f32.mrf.mxu0
    %v1600 = vpop.f32.mrf.mxu0
    %v1601 = vadd.f32 %v1513, %v1600
    %v1602 = vpop.f32.mrf.mxu0
    %1603 = vdwg.mxu0
    %v1604 = vadd.f32 %v1367, %v1598
    %v1605 = vadd.f32 %v1368, %v1601
    %1606 = vst.msk [vmem:[#allocation16] sm:$0xff] %vm152, %v1604
    %1607 = vst.msk [vmem:[#allocation16 + $0x8] sm:$0xff] %vm152, %v1605
    // Predicated region
    $region90: #{tpu_custom_call.1} parent=1 // pred_check
      _
    $region91: #{tpu_custom_call.1} parent=1 // pred_check_branch
      %1609 = sbr.rel (0) target = $region93
    $region92: #{tpu_custom_call.1} parent=1 // pred_region
      %s1611 = ssub.s32 256, 256
      %1612 = vsyncadd [#allocation4], %s1611
      %s1613 = sshll.u32 [#allocation16], 4
      %s1614 = int_to_ptr.vmem [resolvable:$true] %s1613
      %1619 = dma.vmem_to_hbm [thread:$0]  %s1614, 256, %s14, [#allocation4], 128, 128, 8
    $region93: #{tpu_custom_call.1} parent=1 // pred_fallthru
      _
    // Predicated region
    $region94: #{tpu_custom_call.1} parent=1 // pred_check
      _
    $region95: #{tpu_custom_call.1} parent=1 // pred_check_branch
      %1621 = sbr.rel (0) target = $region97
    $region96: #{tpu_custom_call.1} parent=1 // pred_region
      %1622 = dma.done [#allocation4], 256
    $region97: #{tpu_custom_call.1} parent=1 // pred_fallthru
      _
    %1623 = vsyncpa [#allocation3], 1
    %1624 = vsyncpa [#allocation6], 1
    %1625 = vsyncpa [#allocation9], 1
    %1626 = vsyncpa [#allocation12], 1
    %1627 = vsyncpa [#allocation15], 1
    %1628 = vsyncpa [#allocation4], 1

</llo_original>
